<compile_context>
chip_gen: v7x
topology: tpu7x:2x2x1
jax: 0.10.0
libtpu: 0.0.40
codegen_flags: <defaults>
</compile_context>

<pallas_src>
import jax
import jax.numpy as jnp
from jax import lax
from jax.experimental import pallas as pl
from jax.experimental.pallas import tpu as pltpu

MAX_BOX = 50          # self.max_box
BOX_EMB = 32          # config.box_emb_size  (1600 = 50 * 32)
EMB_SIZE = 64         # config.emb_size (Sampler output width)
NUM_CLASSES = 26      # sem_embedding rows / label_decoder out
FLAT = MAX_BOX * BOX_EMB   # 1600
ENC_IN = 32           # encoder operand lanes: [box(4) | onehot(26) | pad(2)]
HEAD_W = 128          # packed lane-dense head slab: [box(4) | exists(1) | label(26) | pad]

# packed head column layout
_EXH_LO, _EXH_HI = 4, 4 + BOX_EMB              # exists hidden cols in stage-1
_LBH_LO, _LBH_HI = _EXH_HI, _EXH_HI + BOX_EMB  # label  hidden cols in stage-1
_EX_COL = 4                                    # exists logit col in stage-2 output
_LB_LO, _LB_HI = 5, 5 + NUM_CLASSES            # label logit cols in stage-2 output


# ----------------------------------------------------------------------------
# Kernel 1: flattened encoder (precomposed linear chain), single full block.
#   operand = [gtbox | onehot(class) | 0]  (BN, 32), built in one vreg-width buffer
#   z_i     = operand @ W_enc + b_enc, masked by box_exists
# ----------------------------------------------------------------------------
def encoder_kernel(box32_ref, ids_ref, exists_ref, w_ref, b_ref, zi_ref):
    col = lax.broadcasted_iota(jnp.int32, box32_ref.shape, 1)       # (BN, 32)
    # gtclass outside [0, 26) silently yields an all-zero class row (no OOB fault).
    onehot = (col == ids_ref[...] + 4).astype(jnp.float32)          # cols 4..29
    operand = box32_ref[...] + onehot                               # box lives in cols 0..3
    zi = jnp.dot(operand, w_ref[...], preferred_element_type=jnp.float32) + b_ref[...]
    zi_ref[...] = zi * exists_ref[...]


# ----------------------------------------------------------------------------
# Kernel 2: aggregator (Sampler.mlp1, probabilistic=False) + mlp_decoder.
#   int8 weights + per-output-column scales; int8->bf16 cast, bf16 MXU, f32 accum.
#   z = (z_flat @ W1q) * s1 + b1      (TB, 64)
#   x = (z      @ Wdq) * sd + bd      (TB, 1600)
# ----------------------------------------------------------------------------
def latent_kernel(zflat_ref, w1q_ref, s1_ref, b1_ref, wdq_ref, sd_ref, bd_ref,
                  z_ref, x_ref):
    w1 = w1q_ref[...].astype(jnp.float32).astype(jnp.bfloat16)      # exact: |q| <= 127
    z = (jnp.dot(zflat_ref[...].astype(jnp.bfloat16), w1,
                 preferred_element_type=jnp.float32) * s1_ref[...] + b1_ref[...])
    z_ref[...] = z
    wd = wdq_ref[...].astype(jnp.float32).astype(jnp.bfloat16)
    x_ref[...] = (jnp.dot(z.astype(jnp.bfloat16), wd,
                          preferred_element_type=jnp.float32) * sd_ref[...] + bd_ref[...])


# ----------------------------------------------------------------------------
# Kernel 3: packed decoder heads, single full block over (B*N) rows.
#   stage 1 (32->128): [box | exists_hidden | label_hidden | 0]
#   ReLU on cols >= 4 (box passes through), stage 2 (128->128) with identity
#   pass-through for box; output slab [box(4) | exists(1) | label(26) | 0].
# ----------------------------------------------------------------------------
def heads_kernel(xi_ref, w1_ref, b1_ref, w2_ref, b2_ref, out_ref):
    h = jnp.dot(xi_ref[...], w1_ref[...],
                preferred_element_type=jnp.float32) + b1_ref[...]        # (BN, 128)
    col = lax.broadcasted_iota(jnp.int32, h.shape, 1)
    g = jnp.where(col >= 4, jnp.maximum(h, 0.0), h)                      # ReLU on exists/label only
    out_ref[...] = jnp.dot(g, w2_ref[...],
                           preferred_element_type=jnp.float32) + b2_ref[...]


# ----------------------------------------------------------------------------
# Raw (module-style) parameter init: weights stored (in, out), bias (1, out).
# ----------------------------------------------------------------------------
def init_params(key):
    ks = jax.random.split(key, 11)

    def lin(k, fan_in, fan_out):
        k1, k2 = jax.random.split(k)
        s = 1.0 / jnp.sqrt(fan_in)
        w = jax.random.uniform(k1, (fan_in, fan_out), jnp.float32, -s, s)
        b = jax.random.uniform(k2, (1, fan_out), jnp.float32, -s, s)
        return w, b

    p = {}
    p["w_be"], p["b_be"] = lin(ks[0], 4, 10)                                # box_encoder
    p["emb"] = jax.random.normal(ks[1], (NUM_CLASSES, 10), jnp.float32)     # sem_embedding
    p["w_c"], p["b_c"] = lin(ks[2], 20, 20)                                 # concat_mlp
    p["w_me"], p["b_me"] = lin(ks[3], 20, BOX_EMB)                          # mlp_encoder
    p["w_mlp1"], p["b_mlp1"] = lin(ks[4], FLAT, EMB_SIZE)                   # Sampler.mlp1
    p["w_dec"], p["b_dec"] = lin(ks[5], EMB_SIZE, FLAT)                     # mlp_decoder
    p["w_box"], p["b_box"] = lin(ks[6], BOX_EMB, 4)                         # box_decoder
    p["w_ex1"], p["b_ex1"] = lin(ks[7], BOX_EMB, BOX_EMB)                   # exist_decoder[0]
    p["w_ex2"], p["b_ex2"] = lin(ks[8], BOX_EMB, 1)                         # exist_decoder[2]
    p["w_lb1"], p["b_lb1"] = lin(ks[9], BOX_EMB, BOX_EMB)                   # label_decoder[0]
    p["w_lb2"], p["b_lb2"] = lin(ks[10], BOX_EMB, NUM_CLASSES)              # label_decoder[2]
    return p


# ----------------------------------------------------------------------------
# Host-side (one-time) weight precompose / packing / quantization for the kernels.
# ----------------------------------------------------------------------------
def _quant_cols_int8(w):
    """Symmetric int8 quantization with per-output-column scales."""
    amax = jnp.max(jnp.abs(w), axis=0, keepdims=True)
    scale = jnp.where(amax > 0, amax / 127.0, 1.0).astype(jnp.float32)
    q = jnp.clip(jnp.round(w / scale), -127, 127).astype(jnp.int8)
    return q, scale


def preprocess_params(p):
    with jax.default_matmul_precision("highest"):   # scoped; no global config mutation
        wc_box = p["w_c"][:10, :]
        wc_sem = p["w_c"][10:, :]
        # Encoder chain is purely linear (no activation) -> fold into one matrix + bias.
        w_enc_box = p["w_be"] @ wc_box @ p["w_me"]                        # (4, 32)
        w_enc_cls = p["emb"] @ wc_sem @ p["w_me"]                         # (26, 32)
        b_enc = (p["b_be"] @ wc_box + p["b_c"]) @ p["w_me"] + p["b_me"]   # (1, 32)

    # Stack into a single (32, 32) encoder weight: rows 0..3 box, rows 4..29 class.
    w_enc = jnp.zeros((ENC_IN, BOX_EMB), jnp.float32)
    w_enc = w_enc.at[0:4, :].set(w_enc_box)
    w_enc = w_enc.at[4:4 + NUM_CLASSES, :].set(w_enc_cls)

    # int8 + per-column scales for the two big latent weights (the only real DMA).
    w_mlp1_q, s_mlp1 = _quant_cols_int8(p["w_mlp1"])                      # (1600, 64) i8
    w_dec_q, s_dec = _quant_cols_int8(p["w_dec"])                         # (64, 1600) i8

    # Packed head stage 1: (32, 128) = [W_box | W_ex1 | W_lb1 | 0]
    w_h1 = jnp.zeros((BOX_EMB, HEAD_W), jnp.float32)
    w_h1 = w_h1.at[:, 0:4].set(p["w_box"])
    w_h1 = w_h1.at[:, _EXH_LO:_EXH_HI].set(p["w_ex1"])
    w_h1 = w_h1.at[:, _LBH_LO:_LBH_HI].set(p["w_lb1"])
    b_h1 = jnp.zeros((1, HEAD_W), jnp.float32)
    b_h1 = b_h1.at[:, 0:4].set(p["b_box"])
    b_h1 = b_h1.at[:, _EXH_LO:_EXH_HI].set(p["b_ex1"])
    b_h1 = b_h1.at[:, _LBH_LO:_LBH_HI].set(p["b_lb1"])

    # Packed head stage 2: identity pass-through for box, W_ex2 / W_lb2 blocks.
    w_h2 = jnp.zeros((HEAD_W, HEAD_W), jnp.float32)
    w_h2 = w_h2.at[0:4, 0:4].set(jnp.eye(4, dtype=jnp.float32))
    w_h2 = w_h2.at[_EXH_LO:_EXH_HI, _EX_COL:_EX_COL + 1].set(p["w_ex2"])
    w_h2 = w_h2.at[_LBH_LO:_LBH_HI, _LB_LO:_LB_HI].set(p["w_lb2"])
    b_h2 = jnp.zeros((1, HEAD_W), jnp.float32)
    b_h2 = b_h2.at[:, _EX_COL:_EX_COL + 1].set(p["b_ex2"])
    b_h2 = b_h2.at[:, _LB_LO:_LB_HI].set(p["b_lb2"])

    return {
        "w_enc": w_enc, "b_enc": b_enc,
        "w_mlp1_q": w_mlp1_q, "s_mlp1": s_mlp1, "b_mlp1": p["b_mlp1"],
        "w_dec_q": w_dec_q, "s_dec": s_dec, "b_dec": p["b_dec"],
        "w_h1": w_h1, "b_h1": b_h1, "w_h2": w_h2, "b_h2": b_h2,
    }


# ----------------------------------------------------------------------------
# Forward wrapper
# ----------------------------------------------------------------------------
@jax.jit
def simple_mlpae_forward(kp, gtbox, box_exists, gtclass):
    B, N, _ = gtbox.shape
    BN = B * N

    # Flatten per-box tensors on host (free contiguous reshapes); pad gtbox to the
    # 32-lane encoder operand width (one-hot is added in-kernel).
    box32 = jnp.pad(gtbox.reshape(BN, 4).astype(jnp.float32),
                    ((0, 0), (0, ENC_IN - 4)))                       # (BN, 32)
    ids = gtclass.reshape(BN, 1).astype(jnp.int32)                   # (BN, 1)
    exists = box_exists.reshape(BN, 1).astype(jnp.float32)           # (BN, 1)

    def full(shape):
        return pl.BlockSpec(shape, lambda i, _s=shape: (0,) * len(_s))

    # --- kernel 1: flattened encoder -> z_i (BN, 32), one full-block step ---
    enc_cost = pl.CostEstimate(
        flops=2 * BN * ENC_IN * BOX_EMB,
        transcendentals=0,
        bytes_accessed=4 * (BN * ENC_IN + 2 * BN + ENC_IN * BOX_EMB
                            + BOX_EMB + BN * BOX_EMB))
    zi_flat = pl.pallas_call(
        encoder_kernel,
        grid=(1,),
        in_specs=[full((BN, ENC_IN)), full((BN, 1)), full((BN, 1)),
                  full((ENC_IN, BOX_EMB)), full((1, BOX_EMB))],
        out_specs=full((BN, BOX_EMB)),
        out_shape=jax.ShapeDtypeStruct((BN, BOX_EMB), jnp.float32),
        compiler_params=pltpu.CompilerParams(dimension_semantics=("arbitrary",)),
        cost_estimate=enc_cost,
    )(box32, ids, exists, kp["w_enc"], kp["b_enc"])

    z_i = zi_flat.reshape(B, N, BOX_EMB)          # torch: z_i (module output)
    z_flat = zi_flat.reshape(B, FLAT)             # torch: z = z_i.view(B, -1)

    # --- kernel 2: Sampler.mlp1 + mlp_decoder -> z (B, 64), x (B, 1600) ---
    # Batch-row tile so this scales to large B without blowing VMEM; weights are
    # constant-index so they stay VMEM resident across batch tiles.
    TB = B if B <= 256 else 256
    gb = pl.cdiv(B, TB)
    lat_cost = pl.CostEstimate(
        flops=2 * B * FLAT * EMB_SIZE + 2 * B * EMB_SIZE * FLAT,
        transcendentals=0,
        bytes_accessed=(2 * FLAT * EMB_SIZE                    # int8 weights (both)
                        + 4 * 2 * (FLAT + EMB_SIZE)            # scales + biases
                        + 4 * B * (FLAT + EMB_SIZE + FLAT)))   # z_flat, z, x
    z, x = pl.pallas_call(
        latent_kernel,
        grid=(gb,),
        in_specs=[pl.BlockSpec((TB, FLAT), lambda i: (i, 0)),
                  full((FLAT, EMB_SIZE)), full((1, EMB_SIZE)), full((1, EMB_SIZE)),
                  full((EMB_SIZE, FLAT)), full((1, FLAT)), full((1, FLAT))],
        out_specs=(pl.BlockSpec((TB, EMB_SIZE), lambda i: (i, 0)),
                   pl.BlockSpec((TB, FLAT), lambda i: (i, 0))),
        out_shape=(jax.ShapeDtypeStruct((B, EMB_SIZE), jnp.float32),
                   jax.ShapeDtypeStruct((B, FLAT), jnp.float32)),
        compiler_params=pltpu.CompilerParams(
            dimension_semantics=(("parallel",) if gb > 1 else ("arbitrary",))),
        cost_estimate=lat_cost,
    )(z_flat, kp["w_mlp1_q"], kp["s_mlp1"], kp["b_mlp1"],
      kp["w_dec_q"], kp["s_dec"], kp["b_dec"])

    # torch: x_i = x.view(B, max_box, -1); flatten boxes again for the heads kernel.
    x_flat = x.reshape(BN, BOX_EMB)

    # --- kernel 3: packed decoder heads -> lane-dense (BN, 128) slab ---
    head_cost = pl.CostEstimate(
        flops=2 * BN * BOX_EMB * HEAD_W + 2 * BN * HEAD_W * HEAD_W,
        transcendentals=0,
        bytes_accessed=4 * (BN * BOX_EMB + BOX_EMB * HEAD_W + HEAD_W
                            + HEAD_W * HEAD_W + HEAD_W + BN * HEAD_W))
    packed = pl.pallas_call(
        heads_kernel,
        grid=(1,),
        in_specs=[full((BN, BOX_EMB)),
                  full((BOX_EMB, HEAD_W)), full((1, HEAD_W)),
                  full((HEAD_W, HEAD_W)), full((1, HEAD_W))],
        out_specs=full((BN, HEAD_W)),
        out_shape=jax.ShapeDtypeStruct((BN, HEAD_W), jnp.float32),
        compiler_params=pltpu.CompilerParams(dimension_semantics=("arbitrary",)),
        cost_estimate=head_cost,
    )(x_flat, kp["w_h1"], kp["b_h1"], kp["w_h2"], kp["b_h2"])

    packed = packed.reshape(B, N, HEAD_W)
    return {
        "z_i": z_i,
        "z": z,
        "box_logits": packed[..., 0:4],
        "exists_logits": packed[..., _EX_COL:_EX_COL + 1],
        "label_logits": packed[..., _LB_LO:_LB_HI],
    }


# ----------------------------------------------------------------------------
# Pure-JAX references.
#   quant_latent=False: exact module math in f32 (scoped highest precision).
#   quant_latent=True : mimics the kernel's int8 + bf16 latent policy (wiring check).
# ----------------------------------------------------------------------------
def reference(params, kp, gtbox, box_exists, gtclass, quant_latent=False):
    B, N, _ = gtbox.shape
    with jax.default_matmul_precision("highest"):
        box = gtbox @ params["w_be"] + params["b_be"]
        sem = params["emb"][gtclass]
        h = jnp.concatenate([box, sem], axis=-1) @ params["w_c"] + params["b_c"]
        z_i = (h @ params["w_me"] + params["b_me"]) * box_exists
        z_flat = z_i.reshape(B, -1)
        if not quant_latent:
            z = z_flat @ params["w_mlp1"] + params["b_mlp1"]
            x = z @ params["w_dec"] + params["b_dec"]
    if quant_latent:
        z = (jnp.dot(z_flat.astype(jnp.bfloat16),
                     kp["w_mlp1_q"].astype(jnp.float32).astype(jnp.bfloat16),
                     preferred_element_type=jnp.float32) * kp["s_mlp1"] + kp["b_mlp1"])
        x = (jnp.dot(z.astype(jnp.bfloat16),
                     kp["w_dec_q"].astype(jnp.float32).astype(jnp.bfloat16),
                     preferred_element_type=jnp.float32) * kp["s_dec"] + kp["b_dec"])
    with jax.default_matmul_precision("highest"):
        x_i = x.reshape(B, N, BOX_EMB)
        box_logits = x_i @ params["w_box"] + params["b_box"]
        ex = (jnp.maximum(x_i @ params["w_ex1"] + params["b_ex1"], 0.0)
              @ params["w_ex2"] + params["b_ex2"])
        lb = (jnp.maximum(x_i @ params["w_lb1"] + params["b_lb1"], 0.0)
              @ params["w_lb2"] + params["b_lb2"])
    return {"z_i": z_i, "z": z, "box_logits": box_logits,
            "exists_logits": ex, "label_logits": lb}


if __name__ == "__main__":
    key = jax.random.PRNGKey(0)
    kparam, k1, k2, k3 = jax.random.split(key, 4)
    params = init_params(kparam)
    kp = preprocess_params(params)

    B, N = 2, MAX_BOX
    gtbox = jax.random.uniform(k1, (B, N, 4), jnp.float32)
    gtclass = jax.random.randint(k2, (B, N), 0, NUM_CLASSES, jnp.int32)
    box_exists = (jax.random.uniform(k3, (B, N, 1)) > 0.3).astype(jnp.float32)

    out = simple_mlpae_forward(kp, gtbox, box_exists, gtclass)
    jax.block_until_ready(out)

    ref32 = reference(params, kp, gtbox, box_exists, gtclass, quant_latent=False)
    refq = reference(params, kp, gtbox, box_exists, gtclass, quant_latent=True)

    # z_i is computed fully in f32 (only reassociated by precomposition) -> tight check.
    assert jnp.allclose(out["z_i"], ref32["z_i"], atol=5e-4, rtol=5e-4), "z_i"
    # Downstream tensors go through the intentional int8/bf16 latent matmuls:
    #  - tight check against the quant-mimicking reference (catches wiring bugs),
    #  - loose check against exact f32 module math (quantization/rounding only).
    for name in ("z", "box_logits", "exists_logits", "label_logits"):
        assert jnp.allclose(out[name], refq[name], atol=2e-3, rtol=2e-3), name + " (quant ref)"
        assert jnp.allclose(out[name], ref32[name], atol=5e-2, rtol=5e-2), name + " (f32 ref)"

    print("KERNEL_OK")
</pallas_src>

<mosaic_0001>
module attributes {stable_mosaic.version = 11 : i64} {
  func.func @encoder_kernel(%arg0: i32, %arg1: memref<100x32xf32, #tpu.memory_space<vmem>>, %arg2: memref<100x1xi32, #tpu.memory_space<vmem>>, %arg3: memref<100x1xf32, #tpu.memory_space<vmem>>, %arg4: memref<32x32xf32, #tpu.memory_space<vmem>>, %arg5: memref<1x32xf32, #tpu.memory_space<vmem>>, %arg6: memref<100x32xf32, #tpu.memory_space<vmem>>) attributes {dimension_semantics = [#tpu.dimension_semantics<arbitrary>], iteration_bounds = array<i64: 1>, scalar_prefetch = 0 : i64, scratch_operands = 0 : i64, tpu.core_type = #tpu.core_type<tc>, window_params = [{pipeline_mode = #tpu.pipeline_mode<synchronous>, transform_indices = @transform_0, window_bounds = array<i64: 100, 32>}, {pipeline_mode = #tpu.pipeline_mode<synchronous>, transform_indices = @transform_1, window_bounds = array<i64: 100, 1>}, {pipeline_mode = #tpu.pipeline_mode<synchronous>, transform_indices = @transform_2, window_bounds = array<i64: 100, 1>}, {pipeline_mode = #tpu.pipeline_mode<synchronous>, transform_indices = @transform_3, window_bounds = array<i64: 32, 32>}, {pipeline_mode = #tpu.pipeline_mode<synchronous>, transform_indices = @transform_4, window_bounds = array<i64: 1, 32>}, {pipeline_mode = #tpu.pipeline_mode<synchronous>, transform_indices = @transform_5, window_bounds = array<i64: 100, 32>}]} {
    %0 = tpu.iota {dimensions = array<i32: 1>} : vector<100x32xi32>
    %c0 = arith.constant 0 : index
    %c0_0 = arith.constant 0 : index
    %1 = vector.load %arg2[%c0, %c0_0] : memref<100x1xi32, #tpu.memory_space<vmem>>, vector<100x1xi32>
    %c4_i32 = arith.constant 4 : i32
    %2 = vector.broadcast %c4_i32 : i32 to vector<100x1xi32>
    %3 = arith.addi %1, %2 : vector<100x1xi32>
    %4 = vector.broadcast %3 : vector<100x1xi32> to vector<100x32xi32>
    %5 = arith.cmpi eq, %0, %4 : vector<100x32xi32>
    %6 = arith.extui %5 : vector<100x32xi1> to vector<100x32xi32>
    %7 = arith.sitofp %6 : vector<100x32xi32> to vector<100x32xf32>
    %c0_1 = arith.constant 0 : index
    %c0_2 = arith.constant 0 : index
    %8 = vector.load %arg1[%c0_1, %c0_2] : memref<100x32xf32, #tpu.memory_space<vmem>>, vector<100x32xf32>
    %9 = arith.addf %8, %7 : vector<100x32xf32>
    %c0_3 = arith.constant 0 : index
    %c0_4 = arith.constant 0 : index
    %10 = vector.load %arg4[%c0_3, %c0_4] : memref<32x32xf32, #tpu.memory_space<vmem>>, vector<32x32xf32>
    %cst = arith.constant dense<0.000000e+00> : vector<100x32xf32>
    %11 = tpu.matmul %9, %10, %cst {dimension_numbers = #tpu.dot_dimension_numbers<[1], [0], [0], [1], [0, 0, 1, 1], [], []>} : vector<100x32xf32>, vector<32x32xf32>, vector<100x32xf32> -> vector<100x32xf32>
    %c0_5 = arith.constant 0 : index
    %c0_6 = arith.constant 0 : index
    %12 = vector.load %arg5[%c0_5, %c0_6] : memref<1x32xf32, #tpu.memory_space<vmem>>, vector<1x32xf32>
    %13 = vector.broadcast %12 : vector<1x32xf32> to vector<100x32xf32>
    %14 = arith.addf %11, %13 : vector<100x32xf32>
    %c0_7 = arith.constant 0 : index
    %c0_8 = arith.constant 0 : index
    %15 = vector.load %arg3[%c0_7, %c0_8] : memref<100x1xf32, #tpu.memory_space<vmem>>, vector<100x1xf32>
    %16 = vector.broadcast %15 : vector<100x1xf32> to vector<100x32xf32>
    %17 = arith.mulf %14, %16 : vector<100x32xf32>
    %c0_9 = arith.constant 0 : index
    %c0_10 = arith.constant 0 : index
    %18 = vector.load %arg6[%c0_9, %c0_10] : memref<100x32xf32, #tpu.memory_space<vmem>>, vector<100x32xf32>
    tpu.vector_store %arg6[%c0_9, %c0_10], %17 {strides = array<i32>} : memref<100x32xf32, #tpu.memory_space<vmem>>, vector<100x32xf32>,
    return
  }
  func.func @transform_0(%arg0: i32) -> (i32, i32) {
    %c0_i32 = arith.constant 0 : i32
    %c0_i32_0 = arith.constant 0 : i32
    %c0_i32_1 = arith.constant 0 : i32
    return %c0_i32, %c0_i32_0 : i32, i32
  }
  func.func @transform_1(%arg0: i32) -> (i32, i32) {
    %c0_i32 = arith.constant 0 : i32
    %c0_i32_0 = arith.constant 0 : i32
    %c0_i32_1 = arith.constant 0 : i32
    return %c0_i32, %c0_i32_0 : i32, i32
  }
  func.func @transform_2(%arg0: i32) -> (i32, i32) {
    %c0_i32 = arith.constant 0 : i32
    %c0_i32_0 = arith.constant 0 : i32
    %c0_i32_1 = arith.constant 0 : i32
    return %c0_i32, %c0_i32_0 : i32, i32
  }
  func.func @transform_3(%arg0: i32) -> (i32, i32) {
    %c0_i32 = arith.constant 0 : i32
    %c0_i32_0 = arith.constant 0 : i32
    %c0_i32_1 = arith.constant 0 : i32
    return %c0_i32, %c0_i32_0 : i32, i32
  }
  func.func @transform_4(%arg0: i32) -> (i32, i32) {
    %c0_i32 = arith.constant 0 : i32
    %c0_i32_0 = arith.constant 0 : i32
    %c0_i32_1 = arith.constant 0 : i32
    return %c0_i32, %c0_i32_0 : i32, i32
  }
  func.func @transform_5(%arg0: i32) -> (i32, i32) {
    %c0_i32 = arith.constant 0 : i32
    %c0_i32_0 = arith.constant 0 : i32
    %c0_i32_1 = arith.constant 0 : i32
    return %c0_i32, %c0_i32_0 : i32, i32
  }
}

module attributes {stable_mosaic.version = 11 : i64} {
  func.func @latent_kernel(%arg0: i32, %arg1: memref<2x1600xf32, #tpu.memory_space<vmem>>, %arg2: memref<1600x64xi8, #tpu.memory_space<vmem>>, %arg3: memref<1x64xf32, #tpu.memory_space<vmem>>, %arg4: memref<1x64xf32, #tpu.memory_space<vmem>>, %arg5: memref<64x1600xi8, #tpu.memory_space<vmem>>, %arg6: memref<1x1600xf32, #tpu.memory_space<vmem>>, %arg7: memref<1x1600xf32, #tpu.memory_space<vmem>>, %arg8: memref<2x64xf32, #tpu.memory_space<vmem>>, %arg9: memref<2x1600xf32, #tpu.memory_space<vmem>>) attributes {dimension_semantics = [#tpu.dimension_semantics<arbitrary>], iteration_bounds = array<i64: 1>, scalar_prefetch = 0 : i64, scratch_operands = 0 : i64, tpu.core_type = #tpu.core_type<tc>, window_params = [{transform_indices = @transform_0, window_bounds = array<i64: 2, 1600>}, {pipeline_mode = #tpu.pipeline_mode<synchronous>, transform_indices = @transform_1, window_bounds = array<i64: 1600, 64>}, {pipeline_mode = #tpu.pipeline_mode<synchronous>, transform_indices = @transform_2, window_bounds = array<i64: 1, 64>}, {pipeline_mode = #tpu.pipeline_mode<synchronous>, transform_indices = @transform_3, window_bounds = array<i64: 1, 64>}, {pipeline_mode = #tpu.pipeline_mode<synchronous>, transform_indices = @transform_4, window_bounds = array<i64: 64, 1600>}, {pipeline_mode = #tpu.pipeline_mode<synchronous>, transform_indices = @transform_5, window_bounds = array<i64: 1, 1600>}, {pipeline_mode = #tpu.pipeline_mode<synchronous>, transform_indices = @transform_6, window_bounds = array<i64: 1, 1600>}, {transform_indices = @transform_7, window_bounds = array<i64: 2, 64>}, {transform_indices = @transform_8, window_bounds = array<i64: 2, 1600>}]} {
    %c0 = arith.constant 0 : index
    %c0_0 = arith.constant 0 : index
    %0 = vector.load %arg2[%c0, %c0_0] : memref<1600x64xi8, #tpu.memory_space<vmem>>, vector<1600x64xi8>
    %1 = arith.sitofp %0 : vector<1600x64xi8> to vector<1600x64xf32>
    %2 = arith.truncf %1 : vector<1600x64xf32> to vector<1600x64xbf16>
    %c0_1 = arith.constant 0 : index
    %c0_2 = arith.constant 0 : index
    %3 = vector.load %arg1[%c0_1, %c0_2] : memref<2x1600xf32, #tpu.memory_space<vmem>>, vector<2x1600xf32>
    %4 = arith.truncf %3 : vector<2x1600xf32> to vector<2x1600xbf16>
    %cst = arith.constant dense<0.000000e+00> : vector<2x64xf32>
    %5 = tpu.matmul %4, %2, %cst {dimension_numbers = #tpu.dot_dimension_numbers<[1], [0], [0], [1], [0, 0, 1, 1], [], []>} : vector<2x1600xbf16>, vector<1600x64xbf16>, vector<2x64xf32> -> vector<2x64xf32>
    %c0_3 = arith.constant 0 : index
    %c0_4 = arith.constant 0 : index
    %6 = vector.load %arg3[%c0_3, %c0_4] : memref<1x64xf32, #tpu.memory_space<vmem>>, vector<1x64xf32>
    %7 = vector.broadcast %6 : vector<1x64xf32> to vector<2x64xf32>
    %8 = arith.mulf %5, %7 : vector<2x64xf32>
    %c0_5 = arith.constant 0 : index
    %c0_6 = arith.constant 0 : index
    %9 = vector.load %arg4[%c0_5, %c0_6] : memref<1x64xf32, #tpu.memory_space<vmem>>, vector<1x64xf32>
    %10 = vector.broadcast %9 : vector<1x64xf32> to vector<2x64xf32>
    %11 = arith.addf %8, %10 : vector<2x64xf32>
    %c0_7 = arith.constant 0 : index
    %c0_8 = arith.constant 0 : index
    %12 = vector.load %arg8[%c0_7, %c0_8] : memref<2x64xf32, #tpu.memory_space<vmem>>, vector<2x64xf32>
    tpu.vector_store %arg8[%c0_7, %c0_8], %11 {strides = array<i32>} : memref<2x64xf32, #tpu.memory_space<vmem>>, vector<2x64xf32>,
    %c0_9 = arith.constant 0 : index
    %c0_10 = arith.constant 0 : index
    %13 = vector.load %arg5[%c0_9, %c0_10] : memref<64x1600xi8, #tpu.memory_space<vmem>>, vector<64x1600xi8>
    %14 = arith.sitofp %13 : vector<64x1600xi8> to vector<64x1600xf32>
    %15 = arith.truncf %14 : vector<64x1600xf32> to vector<64x1600xbf16>
    %16 = arith.truncf %11 : vector<2x64xf32> to vector<2x64xbf16>
    %cst_11 = arith.constant dense<0.000000e+00> : vector<2x1600xf32>
    %17 = tpu.matmul %16, %15, %cst_11 {dimension_numbers = #tpu.dot_dimension_numbers<[1], [0], [0], [1], [0, 0, 1, 1], [], []>} : vector<2x64xbf16>, vector<64x1600xbf16>, vector<2x1600xf32> -> vector<2x1600xf32>
    %c0_12 = arith.constant 0 : index
    %c0_13 = arith.constant 0 : index
    %18 = vector.load %arg6[%c0_12, %c0_13] : memref<1x1600xf32, #tpu.memory_space<vmem>>, vector<1x1600xf32>
    %19 = vector.broadcast %18 : vector<1x1600xf32> to vector<2x1600xf32>
    %20 = arith.mulf %17, %19 : vector<2x1600xf32>
    %c0_14 = arith.constant 0 : index
    %c0_15 = arith.constant 0 : index
    %21 = vector.load %arg7[%c0_14, %c0_15] : memref<1x1600xf32, #tpu.memory_space<vmem>>, vector<1x1600xf32>
    %22 = vector.broadcast %21 : vector<1x1600xf32> to vector<2x1600xf32>
    %23 = arith.addf %20, %22 : vector<2x1600xf32>
    %c0_16 = arith.constant 0 : index
    %c0_17 = arith.constant 0 : index
    %24 = vector.load %arg9[%c0_16, %c0_17] : memref<2x1600xf32, #tpu.memory_space<vmem>>, vector<2x1600xf32>
    tpu.vector_store %arg9[%c0_16, %c0_17], %23 {strides = array<i32>} : memref<2x1600xf32, #tpu.memory_space<vmem>>, vector<2x1600xf32>,
    return
  }
  func.func @transform_0(%arg0: i32) -> (i32, i32) {
    %c0_i32 = arith.constant 0 : i32
    %c0_i32_0 = arith.constant 0 : i32
    return %arg0, %c0_i32 : i32, i32
  }
  func.func @transform_1(%arg0: i32) -> (i32, i32) {
    %c0_i32 = arith.constant 0 : i32
    %c0_i32_0 = arith.constant 0 : i32
    %c0_i32_1 = arith.constant 0 : i32
    return %c0_i32, %c0_i32_0 : i32, i32
  }
  func.func @transform_2(%arg0: i32) -> (i32, i32) {
    %c0_i32 = arith.constant 0 : i32
    %c0_i32_0 = arith.constant 0 : i32
    %c0_i32_1 = arith.constant 0 : i32
    return %c0_i32, %c0_i32_0 : i32, i32
  }
  func.func @transform_3(%arg0: i32) -> (i32, i32) {
    %c0_i32 = arith.constant 0 : i32
    %c0_i32_0 = arith.constant 0 : i32
    %c0_i32_1 = arith.constant 0 : i32
    return %c0_i32, %c0_i32_0 : i32, i32
  }
  func.func @transform_4(%arg0: i32) -> (i32, i32) {
    %c0_i32 = arith.constant 0 : i32
    %c0_i32_0 = arith.constant 0 : i32
    %c0_i32_1 = arith.constant 0 : i32
    return %c0_i32, %c0_i32_0 : i32, i32
  }
  func.func @transform_5(%arg0: i32) -> (i32, i32) {
    %c0_i32 = arith.constant 0 : i32
    %c0_i32_0 = arith.constant 0 : i32
    %c0_i32_1 = arith.constant 0 : i32
    return %c0_i32, %c0_i32_0 : i32, i32
  }
  func.func @transform_6(%arg0: i32) -> (i32, i32) {
    %c0_i32 = arith.constant 0 : i32
    %c0_i32_0 = arith.constant 0 : i32
    %c0_i32_1 = arith.constant 0 : i32
    return %c0_i32, %c0_i32_0 : i32, i32
  }
  func.func @transform_7(%arg0: i32) -> (i32, i32) {
    %c0_i32 = arith.constant 0 : i32
    %c0_i32_0 = arith.constant 0 : i32
    return %arg0, %c0_i32 : i32, i32
  }
  func.func @transform_8(%arg0: i32) -> (i32, i32) {
    %c0_i32 = arith.constant 0 : i32
    %c0_i32_0 = arith.constant 0 : i32
    return %arg0, %c0_i32 : i32, i32
  }
}

module attributes {stable_mosaic.version = 11 : i64} {
  func.func @heads_kernel(%arg0: i32, %arg1: memref<100x32xf32, #tpu.memory_space<vmem>>, %arg2: memref<32x128xf32, #tpu.memory_space<vmem>>, %arg3: memref<1x128xf32, #tpu.memory_space<vmem>>, %arg4: memref<128x128xf32, #tpu.memory_space<vmem>>, %arg5: memref<1x128xf32, #tpu.memory_space<vmem>>, %arg6: memref<100x128xf32, #tpu.memory_space<vmem>>) attributes {dimension_semantics = [#tpu.dimension_semantics<arbitrary>], iteration_bounds = array<i64: 1>, scalar_prefetch = 0 : i64, scratch_operands = 0 : i64, tpu.core_type = #tpu.core_type<tc>, window_params = [{pipeline_mode = #tpu.pipeline_mode<synchronous>, transform_indices = @transform_0, window_bounds = array<i64: 100, 32>}, {pipeline_mode = #tpu.pipeline_mode<synchronous>, transform_indices = @transform_1, window_bounds = array<i64: 32, 128>}, {pipeline_mode = #tpu.pipeline_mode<synchronous>, transform_indices = @transform_2, window_bounds = array<i64: 1, 128>}, {pipeline_mode = #tpu.pipeline_mode<synchronous>, transform_indices = @transform_3, window_bounds = array<i64: 128, 128>}, {pipeline_mode = #tpu.pipeline_mode<synchronous>, transform_indices = @transform_4, window_bounds = array<i64: 1, 128>}, {pipeline_mode = #tpu.pipeline_mode<synchronous>, transform_indices = @transform_5, window_bounds = array<i64: 100, 128>}]} {
    %c0 = arith.constant 0 : index
    %c0_0 = arith.constant 0 : index
    %0 = vector.load %arg1[%c0, %c0_0] : memref<100x32xf32, #tpu.memory_space<vmem>>, vector<100x32xf32>
    %c0_1 = arith.constant 0 : index
    %c0_2 = arith.constant 0 : index
    %1 = vector.load %arg2[%c0_1, %c0_2] : memref<32x128xf32, #tpu.memory_space<vmem>>, vector<32x128xf32>
    %cst = arith.constant dense<0.000000e+00> : vector<100x128xf32>
    %2 = tpu.matmul %0, %1, %cst {dimension_numbers = #tpu.dot_dimension_numbers<[1], [0], [0], [1], [0, 0, 1, 1], [], []>} : vector<100x32xf32>, vector<32x128xf32>, vector<100x128xf32> -> vector<100x128xf32>
    %c0_3 = arith.constant 0 : index
    %c0_4 = arith.constant 0 : index
    %3 = vector.load %arg3[%c0_3, %c0_4] : memref<1x128xf32, #tpu.memory_space<vmem>>, vector<1x128xf32>
    %4 = vector.broadcast %3 : vector<1x128xf32> to vector<100x128xf32>
    %5 = arith.addf %2, %4 : vector<100x128xf32>
    %6 = tpu.iota {dimensions = array<i32: 1>} : vector<100x128xi32>
    %c4_i32 = arith.constant 4 : i32
    %7 = vector.broadcast %c4_i32 : i32 to vector<100x128xi32>
    %8 = arith.cmpi sge, %6, %7 : vector<100x128xi32>
    %cst_5 = arith.constant 0.000000e+00 : f32
    %9 = vector.broadcast %cst_5 : f32 to vector<100x128xf32>
    %10 = arith.maximumf %5, %9 : vector<100x128xf32>
    %11 = arith.select %8, %10, %5 : vector<100x128xi1>, vector<100x128xf32>
    %c0_6 = arith.constant 0 : index
    %c0_7 = arith.constant 0 : index
    %12 = vector.load %arg4[%c0_6, %c0_7] : memref<128x128xf32, #tpu.memory_space<vmem>>, vector<128x128xf32>
    %cst_8 = arith.constant dense<0.000000e+00> : vector<100x128xf32>
    %13 = tpu.matmul %11, %12, %cst_8 {dimension_numbers = #tpu.dot_dimension_numbers<[1], [0], [0], [1], [0, 0, 1, 1], [], []>} : vector<100x128xf32>, vector<128x128xf32>, vector<100x128xf32> -> vector<100x128xf32>
    %c0_9 = arith.constant 0 : index
    %c0_10 = arith.constant 0 : index
    %14 = vector.load %arg5[%c0_9, %c0_10] : memref<1x128xf32, #tpu.memory_space<vmem>>, vector<1x128xf32>
    %15 = vector.broadcast %14 : vector<1x128xf32> to vector<100x128xf32>
    %16 = arith.addf %13, %15 : vector<100x128xf32>
    %c0_11 = arith.constant 0 : index
    %c0_12 = arith.constant 0 : index
    %17 = vector.load %arg6[%c0_11, %c0_12] : memref<100x128xf32, #tpu.memory_space<vmem>>, vector<100x128xf32>
    tpu.vector_store %arg6[%c0_11, %c0_12], %16 {strides = array<i32>} : memref<100x128xf32, #tpu.memory_space<vmem>>, vector<100x128xf32>,
    return
  }
  func.func @transform_0(%arg0: i32) -> (i32, i32) {
    %c0_i32 = arith.constant 0 : i32
    %c0_i32_0 = arith.constant 0 : i32
    %c0_i32_1 = arith.constant 0 : i32
    return %c0_i32, %c0_i32_0 : i32, i32
  }
  func.func @transform_1(%arg0: i32) -> (i32, i32) {
    %c0_i32 = arith.constant 0 : i32
    %c0_i32_0 = arith.constant 0 : i32
    %c0_i32_1 = arith.constant 0 : i32
    return %c0_i32, %c0_i32_0 : i32, i32
  }
  func.func @transform_2(%arg0: i32) -> (i32, i32) {
    %c0_i32 = arith.constant 0 : i32
    %c0_i32_0 = arith.constant 0 : i32
    %c0_i32_1 = arith.constant 0 : i32
    return %c0_i32, %c0_i32_0 : i32, i32
  }
  func.func @transform_3(%arg0: i32) -> (i32, i32) {
    %c0_i32 = arith.constant 0 : i32
    %c0_i32_0 = arith.constant 0 : i32
    %c0_i32_1 = arith.constant 0 : i32
    return %c0_i32, %c0_i32_0 : i32, i32
  }
  func.func @transform_4(%arg0: i32) -> (i32, i32) {
    %c0_i32 = arith.constant 0 : i32
    %c0_i32_0 = arith.constant 0 : i32
    %c0_i32_1 = arith.constant 0 : i32
    return %c0_i32, %c0_i32_0 : i32, i32
  }
  func.func @transform_5(%arg0: i32) -> (i32, i32) {
    %c0_i32 = arith.constant 0 : i32
    %c0_i32_0 = arith.constant 0 : i32
    %c0_i32_1 = arith.constant 0 : i32
    return %c0_i32, %c0_i32_0 : i32, i32
  }
}

</mosaic_0001>

<llo_original>
// kernel: simple_mlpae_forward.3
$region0: #{simple_mlpae_forward.3}
  #allocation0 [shape = 'u32[]', space=smem, size = 0x4, offset = 0x4, fixed_abs, tag = 'smem constant byte address 0x4 - core index']
  #allocation1 [shape = 'u32[144,128]{1,0:T(1,128)}', space=vmem, size = 0x12000, scoped, tag = 'internal scratch']
  %s0 = inlined_call_operand.vmem [shape: f32[100,32], index: 0, kind: input, shape index: {}]
  %s1 = inlined_call_operand.vmem [shape: s32[100,1], index: 1, kind: input, shape index: {}]
  %s2 = inlined_call_operand.vmem [shape: f32[100,1], index: 2, kind: input, shape index: {}]
  %s3 = inlined_call_operand.vmem [shape: f32[32,32], index: 3, kind: input, shape index: {}]
  %s4 = inlined_call_operand.vmem [shape: f32[1,32], index: 4, kind: input, shape index: {}]
  %s5 = inlined_call_operand.vmem [shape: f32[100,32], index: 5, kind: output, shape index: {}]
  %s6 = sld [smem:[#allocation0]]
  $region30: #{simple_mlpae_forward.3} parent=0
    _
  %s8 = ssub.s32 1, %s6
  %s9 = scalar_select 0, %s8, %s6
  // Predicated region
  $region2: #{simple_mlpae_forward.3} parent=0 // pred_check
    _
  $region3: #{simple_mlpae_forward.3} parent=0 // pred_check_branch
    %11 = sbr.rel (0) target = $region5
  $region4: #{simple_mlpae_forward.3} parent=0 // pred_region
    _
  $region5: #{simple_mlpae_forward.3} parent=0 // pred_fallthru
    _
  // Predicated region
  $region6: #{simple_mlpae_forward.3} parent=0 // pred_check
    _
  $region7: #{simple_mlpae_forward.3} parent=0 // pred_check_branch
    %13 = sbr.rel (0) target = $region9
  $region8: #{simple_mlpae_forward.3} parent=0 // pred_region
    _
  $region9: #{simple_mlpae_forward.3} parent=0 // pred_fallthru
    _
  // Predicated region
  $region10: #{simple_mlpae_forward.3} parent=0 // pred_check
    _
  $region11: #{simple_mlpae_forward.3} parent=0 // pred_check_branch
    %15 = sbr.rel (0) target = $region13
  $region12: #{simple_mlpae_forward.3} parent=0 // pred_region
    _
  $region13: #{simple_mlpae_forward.3} parent=0 // pred_fallthru
    _
  // Predicated region
  $region14: #{simple_mlpae_forward.3} parent=0 // pred_check
    _
  $region15: #{simple_mlpae_forward.3} parent=0 // pred_check_branch
    %17 = sbr.rel (0) target = $region17
  $region16: #{simple_mlpae_forward.3} parent=0 // pred_region
    _
  $region17: #{simple_mlpae_forward.3} parent=0 // pred_fallthru
    _
  // Predicated region
  $region18: #{simple_mlpae_forward.3} parent=0 // pred_check
    _
  $region19: #{simple_mlpae_forward.3} parent=0 // pred_check_branch
    %19 = sbr.rel (0) target = $region21
  $region20: #{simple_mlpae_forward.3} parent=0 // pred_region
    _
  $region21: #{simple_mlpae_forward.3} parent=0 // pred_fallthru
    _
  %v20 = vlaneseq
  %v21 = vand.u32 %v20, 127
  %v22 = vld [vmem:[%s1] sm:$0xff]
  %v23 = vld [vmem:[%s1 + $0x8] sm:$0xff]
  %v24 = vld [vmem:[%s1 + $0x10] sm:$0xff]
  %v25 = vld [vmem:[%s1 + $0x18] sm:$0xff]
  %v26 = vld [vmem:[%s1 + $0x20] sm:$0xff]
  %v27 = vld [vmem:[%s1 + $0x28] sm:$0xff]
  %v28 = vld [vmem:[%s1 + $0x30] sm:$0xff]
  %v29 = vld [vmem:[%s1 + $0x38] sm:$0xff]
  %v30 = vld [vmem:[%s1 + $0x40] sm:$0xff]
  %v31 = vld [vmem:[%s1 + $0x48] sm:$0xff]
  %v32 = vld [vmem:[%s1 + $0x50] sm:$0xff]
  %v33 = vld [vmem:[%s1 + $0x58] sm:$0xff]
  %v34 = vld [vmem:[%s1 + $0x60] sm:$0xf]
  %v35 = vadd.s32 %v22, 4
  %v36 = vadd.s32 %v23, 4
  %v37 = vadd.s32 %v24, 4
  %v38 = vadd.s32 %v25, 4
  %v39 = vadd.s32 %v26, 4
  %v40 = vadd.s32 %v27, 4
  %v41 = vadd.s32 %v28, 4
  %v42 = vadd.s32 %v29, 4
  %v43 = vadd.s32 %v30, 4
  %v44 = vadd.s32 %v31, 4
  %v45 = vadd.s32 %v32, 4
  %v46 = vadd.s32 %v33, 4
  %v47 = vadd.s32 %v34, 4
  %48 = vset.pattern.permute.xlu0 0
  %49 = vperm.xlu0 %48, %v35
  %v50 = vpop.permute.xlu0 %49
  %51 = vset.pattern.permute.xlu0 0
  %52 = vperm.xlu0 %51, %v36
  %v53 = vpop.permute.xlu0 %52
  %54 = vset.pattern.permute.xlu0 0
  %55 = vperm.xlu0 %54, %v37
  %v56 = vpop.permute.xlu0 %55
  %57 = vset.pattern.permute.xlu0 0
  %58 = vperm.xlu0 %57, %v38
  %v59 = vpop.permute.xlu0 %58
  %60 = vset.pattern.permute.xlu0 0
  %61 = vperm.xlu0 %60, %v39
  %v62 = vpop.permute.xlu0 %61
  %63 = vset.pattern.permute.xlu0 0
  %64 = vperm.xlu0 %63, %v40
  %v65 = vpop.permute.xlu0 %64
  %66 = vset.pattern.permute.xlu0 0
  %67 = vperm.xlu0 %66, %v41
  %v68 = vpop.permute.xlu0 %67
  %69 = vset.pattern.permute.xlu0 0
  %70 = vperm.xlu0 %69, %v42
  %v71 = vpop.permute.xlu0 %70
  %72 = vset.pattern.permute.xlu0 0
  %73 = vperm.xlu0 %72, %v43
  %v74 = vpop.permute.xlu0 %73
  %75 = vset.pattern.permute.xlu0 0
  %76 = vperm.xlu0 %75, %v44
  %v77 = vpop.permute.xlu0 %76
  %78 = vset.pattern.permute.xlu0 0
  %79 = vperm.xlu0 %78, %v45
  %v80 = vpop.permute.xlu0 %79
  %81 = vset.pattern.permute.xlu0 0
  %82 = vperm.xlu0 %81, %v46
  %v83 = vpop.permute.xlu0 %82
  %84 = vset.pattern.permute.xlu0 0
  %85 = vperm.xlu0 %84, %v47
  %v86 = vpop.permute.xlu0 %85
  %vm87 = vcmp.eq.s32.totalorder %v21, %v50
  %vm88 = vcmp.eq.s32.totalorder %v21, %v53
  %vm89 = vcmp.eq.s32.totalorder %v21, %v56
  %vm90 = vcmp.eq.s32.totalorder %v21, %v59
  %vm91 = vcmp.eq.s32.totalorder %v21, %v62
  %vm92 = vcmp.eq.s32.totalorder %v21, %v65
  %vm93 = vcmp.eq.s32.totalorder %v21, %v68
  %vm94 = vcmp.eq.s32.totalorder %v21, %v71
  %vm95 = vcmp.eq.s32.totalorder %v21, %v74
  %vm96 = vcmp.eq.s32.totalorder %v21, %v77
  %vm97 = vcmp.eq.s32.totalorder %v21, %v80
  %vm98 = vcmp.eq.s32.totalorder %v21, %v83
  %vm99 = vcmp.eq.s32.totalorder %v21, %v86
  %v100 = vsel %vm87, 1, 0
  %v101 = vsel %vm88, 1, 0
  %v102 = vsel %vm89, 1, 0
  %v103 = vsel %vm90, 1, 0
  %v104 = vsel %vm91, 1, 0
  %v105 = vsel %vm92, 1, 0
  %v106 = vsel %vm93, 1, 0
  %v107 = vsel %vm94, 1, 0
  %v108 = vsel %vm95, 1, 0
  %v109 = vsel %vm96, 1, 0
  %v110 = vsel %vm97, 1, 0
  %v111 = vsel %vm98, 1, 0
  %v112 = vsel %vm99, 1, 0
  %v113 = vcvt.s32.f32 %v100
  %v114 = vcvt.s32.f32 %v101
  %v115 = vcvt.s32.f32 %v102
  %v116 = vcvt.s32.f32 %v103
  %v117 = vcvt.s32.f32 %v104
  %v118 = vcvt.s32.f32 %v105
  %v119 = vcvt.s32.f32 %v106
  %v120 = vcvt.s32.f32 %v107
  %v121 = vcvt.s32.f32 %v108
  %v122 = vcvt.s32.f32 %v109
  %v123 = vcvt.s32.f32 %v110
  %v124 = vcvt.s32.f32 %v111
  %v125 = vcvt.s32.f32 %v112
  %v126 = vld [vmem:[%s0] sm:$0xff]
  %v127 = vld [vmem:[%s0 + $0x8] sm:$0xff]
  %v128 = vld [vmem:[%s0 + $0x10] sm:$0xff]
  %v129 = vld [vmem:[%s0 + $0x18] sm:$0xff]
  %v130 = vld [vmem:[%s0 + $0x20] sm:$0xff]
  %v131 = vld [vmem:[%s0 + $0x28] sm:$0xff]
  %v132 = vld [vmem:[%s0 + $0x30] sm:$0xff]
  %v133 = vld [vmem:[%s0 + $0x38] sm:$0xff]
  %v134 = vld [vmem:[%s0 + $0x40] sm:$0xff]
  %v135 = vld [vmem:[%s0 + $0x48] sm:$0xff]
  %v136 = vld [vmem:[%s0 + $0x50] sm:$0xff]
  %v137 = vld [vmem:[%s0 + $0x58] sm:$0xff]
  %v138 = vld [vmem:[%s0 + $0x60] sm:$0xf]
  %v139 = vadd.f32 %v126, %v113
  %v140 = vadd.f32 %v127, %v114
  %v141 = vadd.f32 %v128, %v115
  %v142 = vadd.f32 %v129, %v116
  %v143 = vadd.f32 %v130, %v117
  %v144 = vadd.f32 %v131, %v118
  %v145 = vadd.f32 %v132, %v119
  %v146 = vadd.f32 %v133, %v120
  %v147 = vadd.f32 %v134, %v121
  %v148 = vadd.f32 %v135, %v122
  %v149 = vadd.f32 %v136, %v123
  %v150 = vadd.f32 %v137, %v124
  %v151 = vadd.f32 %v138, %v125
  %v152 = vld [vmem:[%s3] sm:$0xff]
  %v153 = vld [vmem:[%s3 + $0x8] sm:$0xff]
  %v154 = vld [vmem:[%s3 + $0x10] sm:$0xff]
  %v155 = vld [vmem:[%s3 + $0x18] sm:$0xff]
  %v156 = vld [vmem:[%s4] sm:$0x1]
  %v158 = vlaneseq
  %v159 = vshrl.u32 %v158, 7
  %v160 = vsub.s32 0, %v159
  %v161 = vrot.slane %v156, %v160
  %vm163 = vcmask 261120
  %v165 = vsel %vm163, %v139, 0
  %v168 = vsel %vm163, %v140, 0
  %v171 = vsel %vm163, %v141, 0
  %v174 = vsel %vm163, %v142, 0
  %v177 = vsel %vm163, %v143, 0
  %v180 = vsel %vm163, %v144, 0
  %v183 = vsel %vm163, %v145, 0
  %v186 = vsel %vm163, %v146, 0
  %v189 = vsel %vm163, %v147, 0
  %v192 = vsel %vm163, %v148, 0
  %v195 = vsel %vm163, %v149, 0
  %v198 = vsel %vm163, %v150, 0
  %v201 = vsel %vm163, %v151, 0
  %203 = vmatprep.subr.mxu0 0.0
  %204 = vmatpush1.msra.mxu0 %v152
  %205 = vmatprep.subr.mxu0 0.0
  %206 = vmatpush1.msra.mxu0 %v153
  %207 = vmatprep.subr.mxu0 0.0
  %208 = vmatpush1.msra.mxu0 %v154
  %209 = vmatprep.subr.mxu0 0.0
  %210 = vmatpush1.msra.mxu0 %v155
  %211 = vmatprep.subr.mxu0 0.0
  %212 = vmatpush1.msra.mxu0 0.0
  %213 = vmatprep.subr.mxu0 0.0
  %214 = vmatpush1.msra.mxu0 0.0
  %215 = vmatprep.subr.mxu0 0.0
  %216 = vmatpush1.msra.mxu0 0.0
  %217 = vmatprep.subr.mxu0 0.0
  %218 = vmatpush1.msra.mxu0 0.0
  %219 = vmatprep.subr.mxu0 0.0
  %220 = vmatpush1.msra.mxu0 0.0
  %221 = vmatprep.subr.mxu0 0.0
  %222 = vmatpush1.msra.mxu0 0.0
  %223 = vmatprep.subr.mxu0 0.0
  %224 = vmatpush1.msra.mxu0 0.0
  %225 = vmatprep.subr.mxu0 0.0
  %226 = vmatpush1.msra.mxu0 0.0
  %227 = vmatprep.subr.mxu0 0.0
  %228 = vmatpush1.msra.mxu0 0.0
  %229 = vmatprep.subr.mxu0 0.0
  %230 = vmatpush1.msra.mxu0 0.0
  %231 = vmatprep.subr.mxu0 0.0
  %232 = vmatpush1.msra.mxu0 0.0
  %233 = vmatprep.subr.mxu0 0.0
  %234 = vmatpush1.msra.mxu0 0.0
  %235 = vmatprep.subr.mxu0 0.0
  %236 = vmatpush1.msra.mxu0 0.0
  %237 = vmatprep.subr.mxu0 0.0
  %238 = vmatpush1.msra.mxu0 0.0
  %239 = vmatprep.subr.mxu0 0.0
  %240 = vmatpush1.msra.mxu0 0.0
  %241 = vmatprep.subr.mxu0 0.0
  %242 = vmatpush1.msra.mxu0 0.0
  %243 = vmatprep.subr.mxu0 0.0
  %244 = vmatpush1.msra.mxu0 0.0
  %245 = vmatprep.subr.mxu0 0.0
  %246 = vmatpush1.msra.mxu0 0.0
  %247 = vmatprep.subr.mxu0 0.0
  %248 = vmatpush1.msra.mxu0 0.0
  %249 = vmatprep.subr.mxu0 0.0
  %250 = vmatpush1.msra.mxu0 0.0
  %251 = vmatprep.subr.mxu0 0.0
  %252 = vmatpush1.msra.mxu0 0.0
  %253 = vmatprep.subr.mxu0 0.0
  %254 = vmatpush1.msra.mxu0 0.0
  %255 = vmatprep.subr.mxu0 0.0
  %256 = vmatpush1.msra.mxu0 0.0
  %257 = vmatprep.subr.mxu0 0.0
  %258 = vmatpush1.msra.mxu0 0.0
  %259 = vmatprep.subr.mxu0 0.0
  %260 = vmatpush1.msra.mxu0 0.0
  %261 = vmatprep.subr.mxu0 0.0
  %262 = vmatpush1.msra.mxu0 0.0
  %263 = vmatprep.subr.mxu0 0.0
  %264 = vmatpush1.msra.mxu0 0.0
  %265 = vmatprep.subr.mxu0 0.0
  %266 = vmatpush1.msra.mxu0 0.0
  %267 = vmatprep.mubr.f32.mxu0 0.0
  %268 = vmatmul.mubr.f32.gmra.mrb[0].mxu0 %v165
  %v269 = vpop.f32.mrb[0].mxu0
  %v270 = vadd.f32 %v161, %v269
  %v271 = vpop.f32.mrb[0].mxu0
  %272 = vmatprep.mubr.f32.mxu0 0.0
  %273 = vmatmul.mubr.f32.gmra.mrb[0].mxu0 %v168
  %v274 = vpop.f32.mrb[0].mxu0
  %v275 = vadd.f32 %v161, %v274
  %v276 = vpop.f32.mrb[0].mxu0
  %277 = vmatprep.mubr.f32.mxu0 0.0
  %278 = vmatmul.mubr.f32.gmra.mrb[0].mxu0 %v171
  %v279 = vpop.f32.mrb[0].mxu0
  %v280 = vadd.f32 %v161, %v279
  %v281 = vpop.f32.mrb[0].mxu0
  %282 = vmatprep.mubr.f32.mxu0 0.0
  %283 = vmatmul.mubr.f32.gmra.mrb[0].mxu0 %v174
  %v284 = vpop.f32.mrb[0].mxu0
  %v285 = vadd.f32 %v161, %v284
  %v286 = vpop.f32.mrb[0].mxu0
  %287 = vmatprep.mubr.f32.mxu0 0.0
  %288 = vmatmul.mubr.f32.gmra.mrb[0].mxu0 %v177
  %v289 = vpop.f32.mrb[0].mxu0
  %v290 = vadd.f32 %v161, %v289
  %v291 = vpop.f32.mrb[0].mxu0
  %292 = vmatprep.mubr.f32.mxu0 0.0
  %293 = vmatmul.mubr.f32.gmra.mrb[0].mxu0 %v180
  %v294 = vpop.f32.mrb[0].mxu0
  %v295 = vadd.f32 %v161, %v294
  %v296 = vpop.f32.mrb[0].mxu0
  %297 = vmatprep.mubr.f32.mxu0 0.0
  %298 = vmatmul.mubr.f32.gmra.mrb[0].mxu0 %v183
  %v299 = vpop.f32.mrb[0].mxu0
  %v300 = vadd.f32 %v161, %v299
  %v301 = vpop.f32.mrb[0].mxu0
  %302 = vmatprep.mubr.f32.mxu0 0.0
  %303 = vmatmul.mubr.f32.gmra.mrb[0].mxu0 %v186
  %v304 = vpop.f32.mrb[0].mxu0
  %v305 = vadd.f32 %v161, %v304
  %v306 = vpop.f32.mrb[0].mxu0
  %307 = vmatprep.mubr.f32.mxu0 0.0
  %308 = vmatmul.mubr.f32.gmra.mrb[0].mxu0 %v189
  %v309 = vpop.f32.mrb[0].mxu0
  %v310 = vadd.f32 %v161, %v309
  %v311 = vpop.f32.mrb[0].mxu0
  %312 = vmatprep.mubr.f32.mxu0 0.0
  %313 = vmatmul.mubr.f32.gmra.mrb[0].mxu0 %v192
  %v314 = vpop.f32.mrb[0].mxu0
  %v315 = vadd.f32 %v161, %v314
  %v316 = vpop.f32.mrb[0].mxu0
  %317 = vmatprep.mubr.f32.mxu0 0.0
  %318 = vmatmul.mubr.f32.gmra.mrb[0].mxu0 %v195
  %v319 = vpop.f32.mrb[0].mxu0
  %v320 = vadd.f32 %v161, %v319
  %v321 = vpop.f32.mrb[0].mxu0
  %322 = vmatprep.mubr.f32.mxu0 0.0
  %323 = vmatmul.mubr.f32.gmra.mrb[0].mxu0 %v198
  %v324 = vpop.f32.mrb[0].mxu0
  %v325 = vadd.f32 %v161, %v324
  %v326 = vpop.f32.mrb[0].mxu0
  %327 = vmatprep.mubr.f32.mxu0 0.0
  %328 = vmatmul.mubr.f32.gmra.mrb[0].mxu0 %v201
  %v329 = vpop.f32.mrb[0].mxu0
  %v330 = vadd.f32 %v161, %v329
  %v331 = vpop.f32.mrb[0].mxu0
  %332 = vdwg.mxu0
  %v333 = vld [vmem:[%s2] sm:$0xff]
  %v334 = vld [vmem:[%s2 + $0x8] sm:$0xff]
  %v335 = vld [vmem:[%s2 + $0x10] sm:$0xff]
  %v336 = vld [vmem:[%s2 + $0x18] sm:$0xff]
  %v337 = vld [vmem:[%s2 + $0x20] sm:$0xff]
  %v338 = vld [vmem:[%s2 + $0x28] sm:$0xff]
  %v339 = vld [vmem:[%s2 + $0x30] sm:$0xff]
  %v340 = vld [vmem:[%s2 + $0x38] sm:$0xff]
  %v341 = vld [vmem:[%s2 + $0x40] sm:$0xff]
  %v342 = vld [vmem:[%s2 + $0x48] sm:$0xff]
  %v343 = vld [vmem:[%s2 + $0x50] sm:$0xff]
  %v344 = vld [vmem:[%s2 + $0x58] sm:$0xff]
  %v345 = vld [vmem:[%s2 + $0x60] sm:$0xf]
  %347 = vset.pattern.permute.xlu0 0
  %348 = vperm.xlu0 %347, %v333
  %v349 = vpop.permute.xlu0 %348
  %352 = vset.pattern.permute.xlu0 0
  %353 = vperm.xlu0 %352, %v334
  %v354 = vpop.permute.xlu0 %353
  %357 = vset.pattern.permute.xlu0 0
  %358 = vperm.xlu0 %357, %v335
  %v359 = vpop.permute.xlu0 %358
  %362 = vset.pattern.permute.xlu0 0
  %363 = vperm.xlu0 %362, %v336
  %v364 = vpop.permute.xlu0 %363
  %367 = vset.pattern.permute.xlu0 0
  %368 = vperm.xlu0 %367, %v337
  %v369 = vpop.permute.xlu0 %368
  %372 = vset.pattern.permute.xlu0 0
  %373 = vperm.xlu0 %372, %v338
  %v374 = vpop.permute.xlu0 %373
  %377 = vset.pattern.permute.xlu0 0
  %378 = vperm.xlu0 %377, %v339
  %v379 = vpop.permute.xlu0 %378
  %382 = vset.pattern.permute.xlu0 0
  %383 = vperm.xlu0 %382, %v340
  %v384 = vpop.permute.xlu0 %383
  %387 = vset.pattern.permute.xlu0 0
  %388 = vperm.xlu0 %387, %v341
  %v389 = vpop.permute.xlu0 %388
  %392 = vset.pattern.permute.xlu0 0
  %393 = vperm.xlu0 %392, %v342
  %v394 = vpop.permute.xlu0 %393
  %397 = vset.pattern.permute.xlu0 0
  %398 = vperm.xlu0 %397, %v343
  %v399 = vpop.permute.xlu0 %398
  %402 = vset.pattern.permute.xlu0 0
  %403 = vperm.xlu0 %402, %v344
  %v404 = vpop.permute.xlu0 %403
  %407 = vset.pattern.permute.xlu0 0
  %408 = vperm.xlu0 %407, %v345
  %v409 = vpop.permute.xlu0 %408
  %v411 = vmul.f32 %v270, %v349
  %v412 = vmul.f32 %v275, %v354
  %v413 = vmul.f32 %v280, %v359
  %v414 = vmul.f32 %v285, %v364
  %v415 = vmul.f32 %v290, %v369
  %v416 = vmul.f32 %v295, %v374
  %v417 = vmul.f32 %v300, %v379
  %v418 = vmul.f32 %v305, %v384
  %v419 = vmul.f32 %v310, %v389
  %v420 = vmul.f32 %v315, %v394
  %v421 = vmul.f32 %v320, %v399
  %v422 = vmul.f32 %v325, %v404
  %v423 = vmul.f32 %v330, %v409
  %424 = vst.msk [vmem:[%s5] sm:$0xff] %vm163, %v411
  %425 = vst.msk [vmem:[%s5 + $0x8] sm:$0xff] %vm163, %v412
  %426 = vst.msk [vmem:[%s5 + $0x10] sm:$0xff] %vm163, %v413
  %427 = vst.msk [vmem:[%s5 + $0x18] sm:$0xff] %vm163, %v414
  %428 = vst.msk [vmem:[%s5 + $0x20] sm:$0xff] %vm163, %v415
  %429 = vst.msk [vmem:[%s5 + $0x28] sm:$0xff] %vm163, %v416
  %430 = vst.msk [vmem:[%s5 + $0x30] sm:$0xff] %vm163, %v417
  %431 = vst.msk [vmem:[%s5 + $0x38] sm:$0xff] %vm163, %v418
  %432 = vst.msk [vmem:[%s5 + $0x40] sm:$0xff] %vm163, %v419
  %433 = vst.msk [vmem:[%s5 + $0x48] sm:$0xff] %vm163, %v420
  %434 = vst.msk [vmem:[%s5 + $0x50] sm:$0xff] %vm163, %v421
  %435 = vst.msk [vmem:[%s5 + $0x58] sm:$0xff] %vm163, %v422
  %vm436 = vcmask 257024
  %437 = vst.msk [vmem:[%s5 + $0x60] sm:$0xf] %vm436, %v423
  // Predicated region
  $region22: #{simple_mlpae_forward.3} parent=0 // pred_check
    _
  $region23: #{simple_mlpae_forward.3} parent=0 // pred_check_branch
    %439 = sbr.rel (0) target = $region25
  $region24: #{simple_mlpae_forward.3} parent=0 // pred_region
    _
  $region25: #{simple_mlpae_forward.3} parent=0 // pred_fallthru
    _
  // Predicated region
  $region26: #{simple_mlpae_forward.3} parent=0 // pred_check
    _
  $region27: #{simple_mlpae_forward.3} parent=0 // pred_check_branch
    %441 = sbr.rel (0) target = $region29
  $region28: #{simple_mlpae_forward.3} parent=0 // pred_region
    _
  $region29: #{simple_mlpae_forward.3} parent=0 // pred_fallthru
    _

// kernel: simple_mlpae_forward.5
$region0: #{simple_mlpae_forward.5}
  #allocation0 [shape = 'u32[]', space=smem, size = 0x4, offset = 0x4, fixed_abs, tag = 'smem constant byte address 0x4 - core index']
  #allocation1 [shape = 'u32[144,128]{1,0:T(1,128)}', space=vmem, size = 0x12000, scoped, tag = 'internal scratch']
  %s0 = inlined_call_operand.vmem [shape: f32[100,32], index: 0, kind: input, shape index: {}]
  %s1 = inlined_call_operand.vmem [shape: f32[32,128], index: 1, kind: input, shape index: {}]
  %s2 = inlined_call_operand.vmem [shape: f32[1,128], index: 2, kind: input, shape index: {}]
  %s3 = inlined_call_operand.vmem [shape: f32[128,128], index: 3, kind: input, shape index: {}]
  %s4 = inlined_call_operand.vmem [shape: f32[1,128], index: 4, kind: input, shape index: {}]
  %s5 = inlined_call_operand.vmem [shape: f32[100,128], index: 5, kind: output, shape index: {}]
  %s6 = sld [smem:[#allocation0]]
  $region30: #{simple_mlpae_forward.5} parent=0
    _
  %s8 = ssub.s32 1, %s6
  %s9 = scalar_select 0, %s8, %s6
  // Predicated region
  $region2: #{simple_mlpae_forward.5} parent=0 // pred_check
    _
  $region3: #{simple_mlpae_forward.5} parent=0 // pred_check_branch
    %11 = sbr.rel (0) target = $region5
  $region4: #{simple_mlpae_forward.5} parent=0 // pred_region
    _
  $region5: #{simple_mlpae_forward.5} parent=0 // pred_fallthru
    _
  // Predicated region
  $region6: #{simple_mlpae_forward.5} parent=0 // pred_check
    _
  $region7: #{simple_mlpae_forward.5} parent=0 // pred_check_branch
    %13 = sbr.rel (0) target = $region9
  $region8: #{simple_mlpae_forward.5} parent=0 // pred_region
    _
  $region9: #{simple_mlpae_forward.5} parent=0 // pred_fallthru
    _
  // Predicated region
  $region10: #{simple_mlpae_forward.5} parent=0 // pred_check
    _
  $region11: #{simple_mlpae_forward.5} parent=0 // pred_check_branch
    %15 = sbr.rel (0) target = $region13
  $region12: #{simple_mlpae_forward.5} parent=0 // pred_region
    _
  $region13: #{simple_mlpae_forward.5} parent=0 // pred_fallthru
    _
  // Predicated region
  $region14: #{simple_mlpae_forward.5} parent=0 // pred_check
    _
  $region15: #{simple_mlpae_forward.5} parent=0 // pred_check_branch
    %17 = sbr.rel (0) target = $region17
  $region16: #{simple_mlpae_forward.5} parent=0 // pred_region
    _
  $region17: #{simple_mlpae_forward.5} parent=0 // pred_fallthru
    _
  // Predicated region
  $region18: #{simple_mlpae_forward.5} parent=0 // pred_check
    _
  $region19: #{simple_mlpae_forward.5} parent=0 // pred_check_branch
    %19 = sbr.rel (0) target = $region21
  $region20: #{simple_mlpae_forward.5} parent=0 // pred_region
    _
  $region21: #{simple_mlpae_forward.5} parent=0 // pred_fallthru
    _
  %v20 = vld [vmem:[%s0] sm:$0xff]
  %v21 = vld [vmem:[%s0 + $0x8] sm:$0xff]
  %v22 = vld [vmem:[%s0 + $0x10] sm:$0xff]
  %v23 = vld [vmem:[%s0 + $0x18] sm:$0xff]
  %v24 = vld [vmem:[%s0 + $0x20] sm:$0xff]
  %v25 = vld [vmem:[%s0 + $0x28] sm:$0xff]
  %v26 = vld [vmem:[%s0 + $0x30] sm:$0xff]
  %v27 = vld [vmem:[%s0 + $0x38] sm:$0xff]
  %v28 = vld [vmem:[%s0 + $0x40] sm:$0xff]
  %v29 = vld [vmem:[%s0 + $0x48] sm:$0xff]
  %v30 = vld [vmem:[%s0 + $0x50] sm:$0xff]
  %v31 = vld [vmem:[%s0 + $0x58] sm:$0xff]
  %v32 = vld [vmem:[%s0 + $0x60] sm:$0xf]
  %v33 = vld [vmem:[%s1] sm:$0xff]
  %v34 = vld [vmem:[%s1 + $0x8] sm:$0xff]
  %v35 = vld [vmem:[%s1 + $0x10] sm:$0xff]
  %v36 = vld [vmem:[%s1 + $0x18] sm:$0xff]
  %v37 = vld [vmem:[%s2] sm:$0x1]
  %v39 = vlaneseq
  %v40 = vshrl.u32 %v39, 7
  %v41 = vsub.s32 0, %v40
  %v42 = vrot.slane %v37, %v41
  %vm44 = vcmask 261120
  %v46 = vsel %vm44, %v20, 0
  %v49 = vsel %vm44, %v21, 0
  %v52 = vsel %vm44, %v22, 0
  %v55 = vsel %vm44, %v23, 0
  %v58 = vsel %vm44, %v24, 0
  %v61 = vsel %vm44, %v25, 0
  %v64 = vsel %vm44, %v26, 0
  %v67 = vsel %vm44, %v27, 0
  %v70 = vsel %vm44, %v28, 0
  %v73 = vsel %vm44, %v29, 0
  %v76 = vsel %vm44, %v30, 0
  %v79 = vsel %vm44, %v31, 0
  %v82 = vsel %vm44, %v32, 0
  %84 = vmatprep.subr.mxu0 0.0
  %85 = vmatpush1.msra.mxu0 %v33
  %86 = vmatprep.subr.mxu0 0.0
  %87 = vmatpush1.msra.mxu0 %v34
  %88 = vmatprep.subr.mxu0 0.0
  %89 = vmatpush1.msra.mxu0 %v35
  %90 = vmatprep.subr.mxu0 0.0
  %91 = vmatpush1.msra.mxu0 %v36
  %92 = vmatprep.subr.mxu0 0.0
  %93 = vmatpush1.msra.mxu0 0.0
  %94 = vmatprep.subr.mxu0 0.0
  %95 = vmatpush1.msra.mxu0 0.0
  %96 = vmatprep.subr.mxu0 0.0
  %97 = vmatpush1.msra.mxu0 0.0
  %98 = vmatprep.subr.mxu0 0.0
  %99 = vmatpush1.msra.mxu0 0.0
  %100 = vmatprep.subr.mxu0 0.0
  %101 = vmatpush1.msra.mxu0 0.0
  %102 = vmatprep.subr.mxu0 0.0
  %103 = vmatpush1.msra.mxu0 0.0
  %104 = vmatprep.subr.mxu0 0.0
  %105 = vmatpush1.msra.mxu0 0.0
  %106 = vmatprep.subr.mxu0 0.0
  %107 = vmatpush1.msra.mxu0 0.0
  %108 = vmatprep.subr.mxu0 0.0
  %109 = vmatpush1.msra.mxu0 0.0
  %110 = vmatprep.subr.mxu0 0.0
  %111 = vmatpush1.msra.mxu0 0.0
  %112 = vmatprep.subr.mxu0 0.0
  %113 = vmatpush1.msra.mxu0 0.0
  %114 = vmatprep.subr.mxu0 0.0
  %115 = vmatpush1.msra.mxu0 0.0
  %116 = vmatprep.subr.mxu0 0.0
  %117 = vmatpush1.msra.mxu0 0.0
  %118 = vmatprep.subr.mxu0 0.0
  %119 = vmatpush1.msra.mxu0 0.0
  %120 = vmatprep.subr.mxu0 0.0
  %121 = vmatpush1.msra.mxu0 0.0
  %122 = vmatprep.subr.mxu0 0.0
  %123 = vmatpush1.msra.mxu0 0.0
  %124 = vmatprep.subr.mxu0 0.0
  %125 = vmatpush1.msra.mxu0 0.0
  %126 = vmatprep.subr.mxu0 0.0
  %127 = vmatpush1.msra.mxu0 0.0
  %128 = vmatprep.subr.mxu0 0.0
  %129 = vmatpush1.msra.mxu0 0.0
  %130 = vmatprep.subr.mxu0 0.0
  %131 = vmatpush1.msra.mxu0 0.0
  %132 = vmatprep.subr.mxu0 0.0
  %133 = vmatpush1.msra.mxu0 0.0
  %134 = vmatprep.subr.mxu0 0.0
  %135 = vmatpush1.msra.mxu0 0.0
  %136 = vmatprep.subr.mxu0 0.0
  %137 = vmatpush1.msra.mxu0 0.0
  %138 = vmatprep.subr.mxu0 0.0
  %139 = vmatpush1.msra.mxu0 0.0
  %140 = vmatprep.subr.mxu0 0.0
  %141 = vmatpush1.msra.mxu0 0.0
  %142 = vmatprep.subr.mxu0 0.0
  %143 = vmatpush1.msra.mxu0 0.0
  %144 = vmatprep.subr.mxu0 0.0
  %145 = vmatpush1.msra.mxu0 0.0
  %146 = vmatprep.subr.mxu0 0.0
  %147 = vmatpush1.msra.mxu0 0.0
  %148 = vmatprep.mubr.f32.mxu0 0.0
  %149 = vmatmul.mubr.f32.gmra.mrb[0].mxu0 %v46
  %v150 = vpop.f32.mrb[0].mxu0
  %v151 = vadd.f32 %v42, %v150
  %v152 = vpop.f32.mrb[0].mxu0
  %153 = vmatprep.mubr.f32.mxu0 0.0
  %154 = vmatmul.mubr.f32.gmra.mrb[0].mxu0 %v49
  %v155 = vpop.f32.mrb[0].mxu0
  %v156 = vadd.f32 %v42, %v155
  %v157 = vpop.f32.mrb[0].mxu0
  %158 = vmatprep.mubr.f32.mxu0 0.0
  %159 = vmatmul.mubr.f32.gmra.mrb[0].mxu0 %v52
  %v160 = vpop.f32.mrb[0].mxu0
  %v161 = vadd.f32 %v42, %v160
  %v162 = vpop.f32.mrb[0].mxu0
  %163 = vmatprep.mubr.f32.mxu0 0.0
  %164 = vmatmul.mubr.f32.gmra.mrb[0].mxu0 %v55
  %v165 = vpop.f32.mrb[0].mxu0
  %v166 = vadd.f32 %v42, %v165
  %v167 = vpop.f32.mrb[0].mxu0
  %168 = vmatprep.mubr.f32.mxu0 0.0
  %169 = vmatmul.mubr.f32.gmra.mrb[0].mxu0 %v58
  %v170 = vpop.f32.mrb[0].mxu0
  %v171 = vadd.f32 %v42, %v170
  %v172 = vpop.f32.mrb[0].mxu0
  %173 = vmatprep.mubr.f32.mxu0 0.0
  %174 = vmatmul.mubr.f32.gmra.mrb[0].mxu0 %v61
  %v175 = vpop.f32.mrb[0].mxu0
  %v176 = vadd.f32 %v42, %v175
  %v177 = vpop.f32.mrb[0].mxu0
  %178 = vmatprep.mubr.f32.mxu0 0.0
  %179 = vmatmul.mubr.f32.gmra.mrb[0].mxu0 %v64
  %v180 = vpop.f32.mrb[0].mxu0
  %v181 = vadd.f32 %v42, %v180
  %v182 = vpop.f32.mrb[0].mxu0
  %183 = vmatprep.mubr.f32.mxu0 0.0
  %184 = vmatmul.mubr.f32.gmra.mrb[0].mxu0 %v67
  %v185 = vpop.f32.mrb[0].mxu0
  %v186 = vadd.f32 %v42, %v185
  %v187 = vpop.f32.mrb[0].mxu0
  %188 = vmatprep.mubr.f32.mxu0 0.0
  %189 = vmatmul.mubr.f32.gmra.mrb[0].mxu0 %v70
  %v190 = vpop.f32.mrb[0].mxu0
  %v191 = vadd.f32 %v42, %v190
  %v192 = vpop.f32.mrb[0].mxu0
  %193 = vmatprep.mubr.f32.mxu0 0.0
  %194 = vmatmul.mubr.f32.gmra.mrb[0].mxu0 %v73
  %v195 = vpop.f32.mrb[0].mxu0
  %v196 = vadd.f32 %v42, %v195
  %v197 = vpop.f32.mrb[0].mxu0
  %198 = vmatprep.mubr.f32.mxu0 0.0
  %199 = vmatmul.mubr.f32.gmra.mrb[0].mxu0 %v76
  %v200 = vpop.f32.mrb[0].mxu0
  %v201 = vadd.f32 %v42, %v200
  %v202 = vpop.f32.mrb[0].mxu0
  %203 = vmatprep.mubr.f32.mxu0 0.0
  %204 = vmatmul.mubr.f32.gmra.mrb[0].mxu0 %v79
  %v205 = vpop.f32.mrb[0].mxu0
  %v206 = vadd.f32 %v42, %v205
  %v207 = vpop.f32.mrb[0].mxu0
  %208 = vmatprep.mubr.f32.mxu0 0.0
  %209 = vmatmul.mubr.f32.gmra.mrb[0].mxu0 %v82
  %v210 = vpop.f32.mrb[0].mxu0
  %v211 = vadd.f32 %v42, %v210
  %v212 = vpop.f32.mrb[0].mxu0
  %213 = vdwg.mxu0
  %v214 = vlaneseq
  %v215 = vand.u32 %v214, 127
  %vm216 = vcmp.ge.s32.totalorder %v215, 4
  %v217 = vmax.f32 %v151, 0.0
  %v218 = vmax.f32 %v156, 0.0
  %v219 = vmax.f32 %v161, 0.0
  %v220 = vmax.f32 %v166, 0.0
  %v221 = vmax.f32 %v171, 0.0
  %v222 = vmax.f32 %v176, 0.0
  %v223 = vmax.f32 %v181, 0.0
  %v224 = vmax.f32 %v186, 0.0
  %v225 = vmax.f32 %v191, 0.0
  %v226 = vmax.f32 %v196, 0.0
  %v227 = vmax.f32 %v201, 0.0
  %v228 = vmax.f32 %v206, 0.0
  %v229 = vmax.f32 %v211, 0.0
  %v230 = vsel %vm216, %v217, %v151
  %v231 = vsel %vm216, %v218, %v156
  %v232 = vsel %vm216, %v219, %v161
  %v233 = vsel %vm216, %v220, %v166
  %v234 = vsel %vm216, %v221, %v171
  %v235 = vsel %vm216, %v222, %v176
  %v236 = vsel %vm216, %v223, %v181
  %v237 = vsel %vm216, %v224, %v186
  %v238 = vsel %vm216, %v225, %v191
  %v239 = vsel %vm216, %v226, %v196
  %v240 = vsel %vm216, %v227, %v201
  %v241 = vsel %vm216, %v228, %v206
  %v242 = vsel %vm216, %v229, %v211
  %v243 = vld [vmem:[%s3] sm:$0xff]
  %v244 = vld [vmem:[%s3 + $0x8] sm:$0xff]
  %v245 = vld [vmem:[%s3 + $0x10] sm:$0xff]
  %v246 = vld [vmem:[%s3 + $0x18] sm:$0xff]
  %v247 = vld [vmem:[%s3 + $0x20] sm:$0xff]
  %v248 = vld [vmem:[%s3 + $0x28] sm:$0xff]
  %v249 = vld [vmem:[%s3 + $0x30] sm:$0xff]
  %v250 = vld [vmem:[%s3 + $0x38] sm:$0xff]
  %v251 = vld [vmem:[%s3 + $0x40] sm:$0xff]
  %v252 = vld [vmem:[%s3 + $0x48] sm:$0xff]
  %v253 = vld [vmem:[%s3 + $0x50] sm:$0xff]
  %v254 = vld [vmem:[%s3 + $0x58] sm:$0xff]
  %v255 = vld [vmem:[%s3 + $0x60] sm:$0xff]
  %v256 = vld [vmem:[%s3 + $0x68] sm:$0xff]
  %v257 = vld [vmem:[%s3 + $0x70] sm:$0xff]
  %v258 = vld [vmem:[%s3 + $0x78] sm:$0xff]
  %v259 = vld [vmem:[%s4] sm:$0x1]
  %v261 = vlaneseq
  %v262 = vshrl.u32 %v261, 7
  %v263 = vsub.s32 0, %v262
  %v264 = vrot.slane %v259, %v263
  %266 = vmatprep.subr.mxu0 0.0
  %267 = vmatpush1.msra.mxu0 %v243
  %268 = vmatprep.subr.mxu0 0.0
  %269 = vmatpush1.msra.mxu0 %v244
  %270 = vmatprep.subr.mxu0 0.0
  %271 = vmatpush1.msra.mxu0 %v245
  %272 = vmatprep.subr.mxu0 0.0
  %273 = vmatpush1.msra.mxu0 %v246
  %274 = vmatprep.subr.mxu0 0.0
  %275 = vmatpush1.msra.mxu0 %v247
  %276 = vmatprep.subr.mxu0 0.0
  %277 = vmatpush1.msra.mxu0 %v248
  %278 = vmatprep.subr.mxu0 0.0
  %279 = vmatpush1.msra.mxu0 %v249
  %280 = vmatprep.subr.mxu0 0.0
  %281 = vmatpush1.msra.mxu0 %v250
  %282 = vmatprep.subr.mxu0 0.0
  %283 = vmatpush1.msra.mxu0 %v251
  %284 = vmatprep.subr.mxu0 0.0
  %285 = vmatpush1.msra.mxu0 %v252
  %286 = vmatprep.subr.mxu0 0.0
  %287 = vmatpush1.msra.mxu0 %v253
  %288 = vmatprep.subr.mxu0 0.0
  %289 = vmatpush1.msra.mxu0 %v254
  %290 = vmatprep.subr.mxu0 0.0
  %291 = vmatpush1.msra.mxu0 %v255
  %292 = vmatprep.subr.mxu0 0.0
  %293 = vmatpush1.msra.mxu0 %v256
  %294 = vmatprep.subr.mxu0 0.0
  %295 = vmatpush1.msra.mxu0 %v257
  %296 = vmatprep.subr.mxu0 0.0
  %297 = vmatpush1.msra.mxu0 %v258
  %298 = vmatprep.subr.mxu0 0.0
  %299 = vmatpush1.msra.mxu0 0.0
  %300 = vmatprep.subr.mxu0 0.0
  %301 = vmatpush1.msra.mxu0 0.0
  %302 = vmatprep.subr.mxu0 0.0
  %303 = vmatpush1.msra.mxu0 0.0
  %304 = vmatprep.subr.mxu0 0.0
  %305 = vmatpush1.msra.mxu0 0.0
  %306 = vmatprep.subr.mxu0 0.0
  %307 = vmatpush1.msra.mxu0 0.0
  %308 = vmatprep.subr.mxu0 0.0
  %309 = vmatpush1.msra.mxu0 0.0
  %310 = vmatprep.subr.mxu0 0.0
  %311 = vmatpush1.msra.mxu0 0.0
  %312 = vmatprep.subr.mxu0 0.0
  %313 = vmatpush1.msra.mxu0 0.0
  %314 = vmatprep.subr.mxu0 0.0
  %315 = vmatpush1.msra.mxu0 0.0
  %316 = vmatprep.subr.mxu0 0.0
  %317 = vmatpush1.msra.mxu0 0.0
  %318 = vmatprep.subr.mxu0 0.0
  %319 = vmatpush1.msra.mxu0 0.0
  %320 = vmatprep.subr.mxu0 0.0
  %321 = vmatpush1.msra.mxu0 0.0
  %322 = vmatprep.subr.mxu0 0.0
  %323 = vmatpush1.msra.mxu0 0.0
  %324 = vmatprep.subr.mxu0 0.0
  %325 = vmatpush1.msra.mxu0 0.0
  %326 = vmatprep.subr.mxu0 0.0
  %327 = vmatpush1.msra.mxu0 0.0
  %328 = vmatprep.subr.mxu0 0.0
  %329 = vmatpush1.msra.mxu0 0.0
  %330 = vmatprep.mubr.f32.mxu0 0.0
  %331 = vmatmul.mubr.f32.gmra.mrb[0].mxu0 %v230
  %v332 = vpop.f32.mrb[0].mxu0
  %v333 = vadd.f32 %v264, %v332
  %v334 = vpop.f32.mrb[0].mxu0
  %335 = vmatprep.mubr.f32.mxu0 0.0
  %336 = vmatmul.mubr.f32.gmra.mrb[0].mxu0 %v231
  %v337 = vpop.f32.mrb[0].mxu0
  %v338 = vadd.f32 %v264, %v337
  %v339 = vpop.f32.mrb[0].mxu0
  %340 = vmatprep.mubr.f32.mxu0 0.0
  %341 = vmatmul.mubr.f32.gmra.mrb[0].mxu0 %v232
  %v342 = vpop.f32.mrb[0].mxu0
  %v343 = vadd.f32 %v264, %v342
  %v344 = vpop.f32.mrb[0].mxu0
  %345 = vmatprep.mubr.f32.mxu0 0.0
  %346 = vmatmul.mubr.f32.gmra.mrb[0].mxu0 %v233
  %v347 = vpop.f32.mrb[0].mxu0
  %v348 = vadd.f32 %v264, %v347
  %v349 = vpop.f32.mrb[0].mxu0
  %350 = vmatprep.mubr.f32.mxu0 0.0
  %351 = vmatmul.mubr.f32.gmra.mrb[0].mxu0 %v234
  %v352 = vpop.f32.mrb[0].mxu0
  %v353 = vadd.f32 %v264, %v352
  %v354 = vpop.f32.mrb[0].mxu0
  %355 = vmatprep.mubr.f32.mxu0 0.0
  %356 = vmatmul.mubr.f32.gmra.mrb[0].mxu0 %v235
  %v357 = vpop.f32.mrb[0].mxu0
  %v358 = vadd.f32 %v264, %v357
  %v359 = vpop.f32.mrb[0].mxu0
  %360 = vmatprep.mubr.f32.mxu0 0.0
  %361 = vmatmul.mubr.f32.gmra.mrb[0].mxu0 %v236
  %v362 = vpop.f32.mrb[0].mxu0
  %v363 = vadd.f32 %v264, %v362
  %v364 = vpop.f32.mrb[0].mxu0
  %365 = vmatprep.mubr.f32.mxu0 0.0
  %366 = vmatmul.mubr.f32.gmra.mrb[0].mxu0 %v237
  %v367 = vpop.f32.mrb[0].mxu0
  %v368 = vadd.f32 %v264, %v367
  %v369 = vpop.f32.mrb[0].mxu0
  %370 = vmatprep.mubr.f32.mxu0 0.0
  %371 = vmatmul.mubr.f32.gmra.mrb[0].mxu0 %v238
  %v372 = vpop.f32.mrb[0].mxu0
  %v373 = vadd.f32 %v264, %v372
  %v374 = vpop.f32.mrb[0].mxu0
  %375 = vmatprep.mubr.f32.mxu0 0.0
  %376 = vmatmul.mubr.f32.gmra.mrb[0].mxu0 %v239
  %v377 = vpop.f32.mrb[0].mxu0
  %v378 = vadd.f32 %v264, %v377
  %v379 = vpop.f32.mrb[0].mxu0
  %380 = vmatprep.mubr.f32.mxu0 0.0
  %381 = vmatmul.mubr.f32.gmra.mrb[0].mxu0 %v240
  %v382 = vpop.f32.mrb[0].mxu0
  %v383 = vadd.f32 %v264, %v382
  %v384 = vpop.f32.mrb[0].mxu0
  %385 = vmatprep.mubr.f32.mxu0 0.0
  %386 = vmatmul.mubr.f32.gmra.mrb[0].mxu0 %v241
  %v387 = vpop.f32.mrb[0].mxu0
  %v388 = vadd.f32 %v264, %v387
  %v389 = vpop.f32.mrb[0].mxu0
  %390 = vmatprep.mubr.f32.mxu0 0.0
  %391 = vmatmul.mubr.f32.gmra.mrb[0].mxu0 %v242
  %v392 = vpop.f32.mrb[0].mxu0
  %v393 = vadd.f32 %v264, %v392
  %v394 = vpop.f32.mrb[0].mxu0
  %395 = vdwg.mxu0
  %396 = vst [vmem:[%s5] sm:$0xff] %v333
  %397 = vst [vmem:[%s5 + $0x8] sm:$0xff] %v338
  %398 = vst [vmem:[%s5 + $0x10] sm:$0xff] %v343
  %399 = vst [vmem:[%s5 + $0x18] sm:$0xff] %v348
  %400 = vst [vmem:[%s5 + $0x20] sm:$0xff] %v353
  %401 = vst [vmem:[%s5 + $0x28] sm:$0xff] %v358
  %402 = vst [vmem:[%s5 + $0x30] sm:$0xff] %v363
  %403 = vst [vmem:[%s5 + $0x38] sm:$0xff] %v368
  %404 = vst [vmem:[%s5 + $0x40] sm:$0xff] %v373
  %405 = vst [vmem:[%s5 + $0x48] sm:$0xff] %v378
  %406 = vst [vmem:[%s5 + $0x50] sm:$0xff] %v383
  %407 = vst [vmem:[%s5 + $0x58] sm:$0xff] %v388
  %408 = vst [vmem:[%s5 + $0x60] sm:$0xf] %v393
  // Predicated region
  $region22: #{simple_mlpae_forward.5} parent=0 // pred_check
    _
  $region23: #{simple_mlpae_forward.5} parent=0 // pred_check_branch
    %410 = sbr.rel (0) target = $region25
  $region24: #{simple_mlpae_forward.5} parent=0 // pred_region
    _
  $region25: #{simple_mlpae_forward.5} parent=0 // pred_fallthru
    _
  // Predicated region
  $region26: #{simple_mlpae_forward.5} parent=0 // pred_check
    _
  $region27: #{simple_mlpae_forward.5} parent=0 // pred_check_branch
    %412 = sbr.rel (0) target = $region29
  $region28: #{simple_mlpae_forward.5} parent=0 // pred_region
    _
  $region29: #{simple_mlpae_forward.5} parent=0 // pred_fallthru
    _

// kernel: simple_mlpae_forward.4
$region0: #{simple_mlpae_forward.4}
  #allocation0 [shape = 'u32[]', space=smem, size = 0x4, offset = 0x4, fixed_abs, tag = 'smem constant byte address 0x4 - core index']
  #allocation1 [shape = 'u32[144,128]{1,0:T(1,128)}', space=vmem, size = 0x12000, scoped, tag = 'internal scratch']
  %s0 = inlined_call_operand.vmem [shape: f32[2,1600], index: 0, kind: input, shape index: {}]
  %s1 = inlined_call_operand.vmem [shape: s8[1600,64], index: 1, kind: input, shape index: {}]
  %s2 = inlined_call_operand.vmem [shape: f32[1,64], index: 2, kind: input, shape index: {}]
  %s3 = inlined_call_operand.vmem [shape: f32[1,64], index: 3, kind: input, shape index: {}]
  %s4 = inlined_call_operand.vmem [shape: s8[64,1600], index: 4, kind: input, shape index: {}]
  %s5 = inlined_call_operand.vmem [shape: f32[1,1600], index: 5, kind: input, shape index: {}]
  %s6 = inlined_call_operand.vmem [shape: f32[1,1600], index: 6, kind: input, shape index: {}]
  %s7 = inlined_call_operand.hbm [shape: f32[2,64], index: 7, kind: output, shape index: {0}]
  %s8 = inlined_call_operand.vmem [shape: f32[2,1600], index: 8, kind: output, shape index: {1}]
  %9 = xla_tuple %s7, %s8
  %s10 = sld [smem:[#allocation0]]
  $region46: #{simple_mlpae_forward.4} parent=0
    _
  %s12 = ssub.s32 1, %s10
  %s13 = scalar_select 0, %s12, %s10
  $region1: #{simple_mlpae_forward.4} parent=0
    #allocation2 [shape = 'u8[1024]{0}', space=vmem, size = 0x400, scoped, tag = 'output window, operand 0, single buffered']
    #allocation3 [shape = 's32[1]{0}', space=sflag, size = 0x4, scoped, tag = 'scoped memory for simple_mlpae_forward.4']
    %14 = vsyncpa [#allocation3], 0
    // Predicated region
    $region2: #{simple_mlpae_forward.4} parent=1 // pred_check
      _
    $region3: #{simple_mlpae_forward.4} parent=1 // pred_check_branch
      %16 = sbr.rel (0) target = $region5
    $region4: #{simple_mlpae_forward.4} parent=1 // pred_region
      _
    $region5: #{simple_mlpae_forward.4} parent=1 // pred_fallthru
      _
    // Predicated region
    $region6: #{simple_mlpae_forward.4} parent=1 // pred_check
      _
    $region7: #{simple_mlpae_forward.4} parent=1 // pred_check_branch
      %18 = sbr.rel (0) target = $region9
    $region8: #{simple_mlpae_forward.4} parent=1 // pred_region
      _
    $region9: #{simple_mlpae_forward.4} parent=1 // pred_fallthru
      _
    // Predicated region
    $region10: #{simple_mlpae_forward.4} parent=1 // pred_check
      _
    $region11: #{simple_mlpae_forward.4} parent=1 // pred_check_branch
      %20 = sbr.rel (0) target = $region13
    $region12: #{simple_mlpae_forward.4} parent=1 // pred_region
      _
    $region13: #{simple_mlpae_forward.4} parent=1 // pred_fallthru
      _
    // Predicated region
    $region14: #{simple_mlpae_forward.4} parent=1 // pred_check
      _
    $region15: #{simple_mlpae_forward.4} parent=1 // pred_check_branch
      %22 = sbr.rel (0) target = $region17
    $region16: #{simple_mlpae_forward.4} parent=1 // pred_region
      _
    $region17: #{simple_mlpae_forward.4} parent=1 // pred_fallthru
      _
    // Predicated region
    $region18: #{simple_mlpae_forward.4} parent=1 // pred_check
      _
    $region19: #{simple_mlpae_forward.4} parent=1 // pred_check_branch
      %24 = sbr.rel (0) target = $region21
    $region20: #{simple_mlpae_forward.4} parent=1 // pred_region
      _
    $region21: #{simple_mlpae_forward.4} parent=1 // pred_fallthru
      _
    // Predicated region
    $region22: #{simple_mlpae_forward.4} parent=1 // pred_check
      _
    $region23: #{simple_mlpae_forward.4} parent=1 // pred_check_branch
      %26 = sbr.rel (0) target = $region25
    $region24: #{simple_mlpae_forward.4} parent=1 // pred_region
      _
    $region25: #{simple_mlpae_forward.4} parent=1 // pred_fallthru
      _
    // Predicated region
    $region26: #{simple_mlpae_forward.4} parent=1 // pred_check
      _
    $region27: #{simple_mlpae_forward.4} parent=1 // pred_check_branch
      %28 = sbr.rel (0) target = $region29
    $region28: #{simple_mlpae_forward.4} parent=1 // pred_region
      _
    $region29: #{simple_mlpae_forward.4} parent=1 // pred_fallthru
      _
    %v30 = vld [vmem:[%s1] sm:$0xff]
    %v31 = vld [vmem:[%s1 + $0x8] sm:$0xff]
    %v32 = vld [vmem:[%s1 + $0x10] sm:$0xff]
    %v33 = vld [vmem:[%s1 + $0x18] sm:$0xff]
    %v34 = vld [vmem:[%s1 + $0x20] sm:$0xff]
    %v35 = vld [vmem:[%s1 + $0x28] sm:$0xff]
    %v36 = vld [vmem:[%s1 + $0x30] sm:$0xff]
    %v37 = vld [vmem:[%s1 + $0x38] sm:$0xff]
    %v38 = vld [vmem:[%s1 + $0x40] sm:$0xff]
    %v39 = vld [vmem:[%s1 + $0x48] sm:$0xff]
    %v40 = vld [vmem:[%s1 + $0x50] sm:$0xff]
    %v41 = vld [vmem:[%s1 + $0x58] sm:$0xff]
    %v42 = vld [vmem:[%s1 + $0x60] sm:$0xff]
    %v43 = vld [vmem:[%s1 + $0x68] sm:$0xff]
    %v44 = vld [vmem:[%s1 + $0x70] sm:$0xff]
    %v45 = vld [vmem:[%s1 + $0x78] sm:$0xff]
    %v46 = vld [vmem:[%s1 + $0x80] sm:$0xff]
    %v47 = vld [vmem:[%s1 + $0x88] sm:$0xff]
    %v48 = vld [vmem:[%s1 + $0x90] sm:$0xff]
    %v49 = vld [vmem:[%s1 + $0x98] sm:$0xff]
    %v50 = vld [vmem:[%s1 + $0xa0] sm:$0xff]
    %v51 = vld [vmem:[%s1 + $0xa8] sm:$0xff]
    %v52 = vld [vmem:[%s1 + $0xb0] sm:$0xff]
    %v53 = vld [vmem:[%s1 + $0xb8] sm:$0xff]
    %v54 = vld [vmem:[%s1 + $0xc0] sm:$0xff]
    %v55 = vld [vmem:[%s1 + $0xc8] sm:$0xff]
    %v56 = vld [vmem:[%s1 + $0xd0] sm:$0xff]
    %v57 = vld [vmem:[%s1 + $0xd8] sm:$0xff]
    %v58 = vld [vmem:[%s1 + $0xe0] sm:$0xff]
    %v59 = vld [vmem:[%s1 + $0xe8] sm:$0xff]
    %v60 = vld [vmem:[%s1 + $0xf0] sm:$0xff]
    %v61 = vld [vmem:[%s1 + $0xf8] sm:$0xff]
    %v62 = vld [vmem:[%s1 + $0x100] sm:$0xff]
    %v63 = vld [vmem:[%s1 + $0x108] sm:$0xff]
    %v64 = vld [vmem:[%s1 + $0x110] sm:$0xff]
    %v65 = vld [vmem:[%s1 + $0x118] sm:$0xff]
    %v66 = vld [vmem:[%s1 + $0x120] sm:$0xff]
    %v67 = vld [vmem:[%s1 + $0x128] sm:$0xff]
    %v68 = vld [vmem:[%s1 + $0x130] sm:$0xff]
    %v69 = vld [vmem:[%s1 + $0x138] sm:$0xff]
    %v70 = vld [vmem:[%s1 + $0x140] sm:$0xff]
    %v71 = vld [vmem:[%s1 + $0x148] sm:$0xff]
    %v72 = vld [vmem:[%s1 + $0x150] sm:$0xff]
    %v73 = vld [vmem:[%s1 + $0x158] sm:$0xff]
    %v74 = vld [vmem:[%s1 + $0x160] sm:$0xff]
    %v75 = vld [vmem:[%s1 + $0x168] sm:$0xff]
    %v76 = vld [vmem:[%s1 + $0x170] sm:$0xff]
    %v77 = vld [vmem:[%s1 + $0x178] sm:$0xff]
    %v78 = vld [vmem:[%s1 + $0x180] sm:$0xff]
    %v79 = vld [vmem:[%s1 + $0x188] sm:$0xff]
    %v80 = vunpack.c.l.s8.bf16 %v30
    %v81 = vunpack.c.h.s8.bf16 %v30
    %v82 = vunpack.c.l.s8.bf16 %v31
    %v83 = vunpack.c.h.s8.bf16 %v31
    %v84 = vunpack.c.l.s8.bf16 %v32
    %v85 = vunpack.c.h.s8.bf16 %v32
    %v86 = vunpack.c.l.s8.bf16 %v33
    %v87 = vunpack.c.h.s8.bf16 %v33
    %v88 = vunpack.c.l.s8.bf16 %v34
    %v89 = vunpack.c.h.s8.bf16 %v34
    %v90 = vunpack.c.l.s8.bf16 %v35
    %v91 = vunpack.c.h.s8.bf16 %v35
    %v92 = vunpack.c.l.s8.bf16 %v36
    %v93 = vunpack.c.h.s8.bf16 %v36
    %v94 = vunpack.c.l.s8.bf16 %v37
    %v95 = vunpack.c.h.s8.bf16 %v37
    %v96 = vunpack.c.l.s8.bf16 %v38
    %v97 = vunpack.c.h.s8.bf16 %v38
    %v98 = vunpack.c.l.s8.bf16 %v39
    %v99 = vunpack.c.h.s8.bf16 %v39
    %v100 = vunpack.c.l.s8.bf16 %v40
    %v101 = vunpack.c.h.s8.bf16 %v40
    %v102 = vunpack.c.l.s8.bf16 %v41
    %v103 = vunpack.c.h.s8.bf16 %v41
    %v104 = vunpack.c.l.s8.bf16 %v42
    %v105 = vunpack.c.h.s8.bf16 %v42
    %v106 = vunpack.c.l.s8.bf16 %v43
    %v107 = vunpack.c.h.s8.bf16 %v43
    %v108 = vunpack.c.l.s8.bf16 %v44
    %v109 = vunpack.c.h.s8.bf16 %v44
    %v110 = vunpack.c.l.s8.bf16 %v45
    %v111 = vunpack.c.h.s8.bf16 %v45
    %v112 = vunpack.c.l.s8.bf16 %v46
    %v113 = vunpack.c.h.s8.bf16 %v46
    %v114 = vunpack.c.l.s8.bf16 %v47
    %v115 = vunpack.c.h.s8.bf16 %v47
    %v116 = vunpack.c.l.s8.bf16 %v48
    %v117 = vunpack.c.h.s8.bf16 %v48
    %v118 = vunpack.c.l.s8.bf16 %v49
    %v119 = vunpack.c.h.s8.bf16 %v49
    %v120 = vunpack.c.l.s8.bf16 %v50
    %v121 = vunpack.c.h.s8.bf16 %v50
    %v122 = vunpack.c.l.s8.bf16 %v51
    %v123 = vunpack.c.h.s8.bf16 %v51
    %v124 = vunpack.c.l.s8.bf16 %v52
    %v125 = vunpack.c.h.s8.bf16 %v52
    %v126 = vunpack.c.l.s8.bf16 %v53
    %v127 = vunpack.c.h.s8.bf16 %v53
    %v128 = vunpack.c.l.s8.bf16 %v54
    %v129 = vunpack.c.h.s8.bf16 %v54
    %v130 = vunpack.c.l.s8.bf16 %v55
    %v131 = vunpack.c.h.s8.bf16 %v55
    %v132 = vunpack.c.l.s8.bf16 %v56
    %v133 = vunpack.c.h.s8.bf16 %v56
    %v134 = vunpack.c.l.s8.bf16 %v57
    %v135 = vunpack.c.h.s8.bf16 %v57
    %v136 = vunpack.c.l.s8.bf16 %v58
    %v137 = vunpack.c.h.s8.bf16 %v58
    %v138 = vunpack.c.l.s8.bf16 %v59
    %v139 = vunpack.c.h.s8.bf16 %v59
    %v140 = vunpack.c.l.s8.bf16 %v60
    %v141 = vunpack.c.h.s8.bf16 %v60
    %v142 = vunpack.c.l.s8.bf16 %v61
    %v143 = vunpack.c.h.s8.bf16 %v61
    %v144 = vunpack.c.l.s8.bf16 %v62
    %v145 = vunpack.c.h.s8.bf16 %v62
    %v146 = vunpack.c.l.s8.bf16 %v63
    %v147 = vunpack.c.h.s8.bf16 %v63
    %v148 = vunpack.c.l.s8.bf16 %v64
    %v149 = vunpack.c.h.s8.bf16 %v64
    %v150 = vunpack.c.l.s8.bf16 %v65
    %v151 = vunpack.c.h.s8.bf16 %v65
    %v152 = vunpack.c.l.s8.bf16 %v66
    %v153 = vunpack.c.h.s8.bf16 %v66
    %v154 = vunpack.c.l.s8.bf16 %v67
    %v155 = vunpack.c.h.s8.bf16 %v67
    %v156 = vunpack.c.l.s8.bf16 %v68
    %v157 = vunpack.c.h.s8.bf16 %v68
    %v158 = vunpack.c.l.s8.bf16 %v69
    %v159 = vunpack.c.h.s8.bf16 %v69
    %v160 = vunpack.c.l.s8.bf16 %v70
    %v161 = vunpack.c.h.s8.bf16 %v70
    %v162 = vunpack.c.l.s8.bf16 %v71
    %v163 = vunpack.c.h.s8.bf16 %v71
    %v164 = vunpack.c.l.s8.bf16 %v72
    %v165 = vunpack.c.h.s8.bf16 %v72
    %v166 = vunpack.c.l.s8.bf16 %v73
    %v167 = vunpack.c.h.s8.bf16 %v73
    %v168 = vunpack.c.l.s8.bf16 %v74
    %v169 = vunpack.c.h.s8.bf16 %v74
    %v170 = vunpack.c.l.s8.bf16 %v75
    %v171 = vunpack.c.h.s8.bf16 %v75
    %v172 = vunpack.c.l.s8.bf16 %v76
    %v173 = vunpack.c.h.s8.bf16 %v76
    %v174 = vunpack.c.l.s8.bf16 %v77
    %v175 = vunpack.c.h.s8.bf16 %v77
    %v176 = vunpack.c.l.s8.bf16 %v78
    %v177 = vunpack.c.h.s8.bf16 %v78
    %v178 = vunpack.c.l.s8.bf16 %v79
    %v179 = vunpack.c.h.s8.bf16 %v79
    %v180 = vld [vmem:[%s0] sm:$0xff]
    %v181 = vld [vmem:[%s0 + $0x8] sm:$0xff]
    %v182 = vld [vmem:[%s0 + $0x10] sm:$0xff]
    %v183 = vld [vmem:[%s0 + $0x18] sm:$0x3]
    %v188 = vcombine.high %v180, %v180
    %v190 = vunpack.c.l.s4 1983009808
    %v191 = vunpack.c.0.s8 %v190
    %v192 = vlaneseq
    %v193 = vshrl.u32 %v192, 7
    %v194 = vsub.s32 %v191, %v193
    %v195 = vrot.slane %v180, %v194
    %v197 = vunpack.c.l.s4 1983009808
    %v198 = vunpack.c.0.s8 %v197
    %v199 = vlaneseq
    %v200 = vshrl.u32 %v199, 7
    %v201 = vsub.s32 %v198, %v200
    %v202 = vrot.slane %v188, %v201
    %v203 = vcombine.high %v195, %v195
    %v204 = vcombine.high %v202, %v202
    %v205 = vcombine.high %v181, %v181
    %v207 = vunpack.c.l.s4 1983009808
    %v208 = vunpack.c.0.s8 %v207
    %v209 = vlaneseq
    %v210 = vshrl.u32 %v209, 7
    %v211 = vsub.s32 %v208, %v210
    %v212 = vrot.slane %v181, %v211
    %v214 = vunpack.c.l.s4 1983009808
    %v215 = vunpack.c.0.s8 %v214
    %v216 = vlaneseq
    %v217 = vshrl.u32 %v216, 7
    %v218 = vsub.s32 %v215, %v217
    %v219 = vrot.slane %v205, %v218
    %v220 = vcombine.high %v212, %v212
    %v221 = vcombine.high %v219, %v219
    %v222 = vcombine.high %v182, %v182
    %v224 = vunpack.c.l.s4 1983009808
    %v225 = vunpack.c.0.s8 %v224
    %v226 = vlaneseq
    %v227 = vshrl.u32 %v226, 7
    %v228 = vsub.s32 %v225, %v227
    %v229 = vrot.slane %v182, %v228
    %v231 = vunpack.c.l.s4 1983009808
    %v232 = vunpack.c.0.s8 %v231
    %v233 = vlaneseq
    %v234 = vshrl.u32 %v233, 7
    %v235 = vsub.s32 %v232, %v234
    %v236 = vrot.slane %v222, %v235
    %v237 = vcombine.high %v229, %v229
    %v238 = vcombine.high %v236, %v236
    %v240 = vunpack.c.l.s4 1983009808
    %v241 = vunpack.c.0.s8 %v240
    %v242 = vlaneseq
    %v243 = vshrl.u32 %v242, 7
    %v244 = vsub.s32 %v241, %v243
    %v245 = vrot.slane %v183, %v244
    %v259 = vpack.c.bf16 %v195, %v195
    %v260 = vpack.c.bf16 %v203, %v203
    %v261 = vpack.c.bf16 %v202, %v202
    %v262 = vpack.c.bf16 %v204, %v204
    %v263 = vpack.c.bf16 %v212, %v212
    %v264 = vpack.c.bf16 %v220, %v220
    %v265 = vpack.c.bf16 %v219, %v219
    %v266 = vpack.c.bf16 %v221, %v221
    %v267 = vpack.c.bf16 %v229, %v229
    %v268 = vpack.c.bf16 %v237, %v237
    %v269 = vpack.c.bf16 %v236, %v236
    %v270 = vpack.c.bf16 %v238, %v238
    %v271 = vpack.c.bf16 %v245, %v245
    %vm272 = vcmask 523264
    %v274 = vsel %vm272, %v271, 0
    %276 = vmatprep.subr.bf16.mxu0 0
    %277 = vmatpush1.bf16.msra.mxu0 %v80
    %278 = vmatprep.subr.bf16.mxu0 0
    %279 = vmatpush1.bf16.msra.mxu0 %v81
    %280 = vmatprep.subr.bf16.mxu0 0
    %281 = vmatpush1.bf16.msra.mxu0 %v82
    %282 = vmatprep.subr.bf16.mxu0 0
    %283 = vmatpush1.bf16.msra.mxu0 %v83
    %284 = vmatprep.subr.bf16.mxu0 0
    %285 = vmatpush1.bf16.msra.mxu0 %v84
    %286 = vmatprep.subr.bf16.mxu0 0
    %287 = vmatpush1.bf16.msra.mxu0 %v85
    %288 = vmatprep.subr.bf16.mxu0 0
    %289 = vmatpush1.bf16.msra.mxu0 %v86
    %290 = vmatprep.subr.bf16.mxu0 0
    %291 = vmatpush1.bf16.msra.mxu0 %v87
    %292 = vmatprep.subr.bf16.mxu0 0
    %293 = vmatpush1.bf16.msra.mxu0 %v88
    %294 = vmatprep.subr.bf16.mxu0 0
    %295 = vmatpush1.bf16.msra.mxu0 %v89
    %296 = vmatprep.subr.bf16.mxu0 0
    %297 = vmatpush1.bf16.msra.mxu0 %v90
    %298 = vmatprep.subr.bf16.mxu0 0
    %299 = vmatpush1.bf16.msra.mxu0 %v91
    %300 = vmatprep.subr.bf16.mxu0 0
    %301 = vmatpush1.bf16.msra.mxu0 %v92
    %302 = vmatprep.subr.bf16.mxu0 0
    %303 = vmatpush1.bf16.msra.mxu0 %v93
    %304 = vmatprep.subr.bf16.mxu0 0
    %305 = vmatpush1.bf16.msra.mxu0 %v94
    %306 = vmatprep.subr.bf16.mxu0 0
    %307 = vmatpush1.bf16.msra.mxu0 %v95
    %308 = vmatprep.mubr.bf16.mxu0 %v260
    %309 = vmatmul.mubr.bf16.gmra.mrb[0].mxu0 %v259
    %v310 = vpop.f32.mrb[0].mxu0
    %v311 = vadd.f32 0.0, %v310
    %v312 = vpop.f32.mrb[0].mxu0
    %v313 = vpop.f32.mrb[0].mxu0
    %v314 = vpop.f32.mrb[0].mxu0
    %315 = vdwg.mxu0
    %316 = vmatprep.subr.bf16.mxu0 0
    %317 = vmatpush1.bf16.msra.mxu0 %v96
    %318 = vmatprep.subr.bf16.mxu0 0
    %319 = vmatpush1.bf16.msra.mxu0 %v97
    %320 = vmatprep.subr.bf16.mxu0 0
    %321 = vmatpush1.bf16.msra.mxu0 %v98
    %322 = vmatprep.subr.bf16.mxu0 0
    %323 = vmatpush1.bf16.msra.mxu0 %v99
    %324 = vmatprep.subr.bf16.mxu0 0
    %325 = vmatpush1.bf16.msra.mxu0 %v100
    %326 = vmatprep.subr.bf16.mxu0 0
    %327 = vmatpush1.bf16.msra.mxu0 %v101
    %328 = vmatprep.subr.bf16.mxu0 0
    %329 = vmatpush1.bf16.msra.mxu0 %v102
    %330 = vmatprep.subr.bf16.mxu0 0
    %331 = vmatpush1.bf16.msra.mxu0 %v103
    %332 = vmatprep.subr.bf16.mxu0 0
    %333 = vmatpush1.bf16.msra.mxu0 %v104
    %334 = vmatprep.subr.bf16.mxu0 0
    %335 = vmatpush1.bf16.msra.mxu0 %v105
    %336 = vmatprep.subr.bf16.mxu0 0
    %337 = vmatpush1.bf16.msra.mxu0 %v106
    %338 = vmatprep.subr.bf16.mxu0 0
    %339 = vmatpush1.bf16.msra.mxu0 %v107
    %340 = vmatprep.subr.bf16.mxu0 0
    %341 = vmatpush1.bf16.msra.mxu0 %v108
    %342 = vmatprep.subr.bf16.mxu0 0
    %343 = vmatpush1.bf16.msra.mxu0 %v109
    %344 = vmatprep.subr.bf16.mxu0 0
    %345 = vmatpush1.bf16.msra.mxu0 %v110
    %346 = vmatprep.subr.bf16.mxu0 0
    %347 = vmatpush1.bf16.msra.mxu0 %v111
    %348 = vmatprep.mubr.bf16.mxu0 %v262
    %349 = vmatmul.mubr.bf16.gmra.mrb[0].mxu0 %v261
    %v350 = vpop.f32.mrb[0].mxu0
    %v351 = vadd.f32 %v311, %v350
    %v352 = vpop.f32.mrb[0].mxu0
    %v353 = vpop.f32.mrb[0].mxu0
    %v354 = vpop.f32.mrb[0].mxu0
    %355 = vdwg.mxu0
    %356 = vmatprep.subr.bf16.mxu0 0
    %357 = vmatpush1.bf16.msra.mxu0 %v112
    %358 = vmatprep.subr.bf16.mxu0 0
    %359 = vmatpush1.bf16.msra.mxu0 %v113
    %360 = vmatprep.subr.bf16.mxu0 0
    %361 = vmatpush1.bf16.msra.mxu0 %v114
    %362 = vmatprep.subr.bf16.mxu0 0
    %363 = vmatpush1.bf16.msra.mxu0 %v115
    %364 = vmatprep.subr.bf16.mxu0 0
    %365 = vmatpush1.bf16.msra.mxu0 %v116
    %366 = vmatprep.subr.bf16.mxu0 0
    %367 = vmatpush1.bf16.msra.mxu0 %v117
    %368 = vmatprep.subr.bf16.mxu0 0
    %369 = vmatpush1.bf16.msra.mxu0 %v118
    %370 = vmatprep.subr.bf16.mxu0 0
    %371 = vmatpush1.bf16.msra.mxu0 %v119
    %372 = vmatprep.subr.bf16.mxu0 0
    %373 = vmatpush1.bf16.msra.mxu0 %v120
    %374 = vmatprep.subr.bf16.mxu0 0
    %375 = vmatpush1.bf16.msra.mxu0 %v121
    %376 = vmatprep.subr.bf16.mxu0 0
    %377 = vmatpush1.bf16.msra.mxu0 %v122
    %378 = vmatprep.subr.bf16.mxu0 0
    %379 = vmatpush1.bf16.msra.mxu0 %v123
    %380 = vmatprep.subr.bf16.mxu0 0
    %381 = vmatpush1.bf16.msra.mxu0 %v124
    %382 = vmatprep.subr.bf16.mxu0 0
    %383 = vmatpush1.bf16.msra.mxu0 %v125
    %384 = vmatprep.subr.bf16.mxu0 0
    %385 = vmatpush1.bf16.msra.mxu0 %v126
    %386 = vmatprep.subr.bf16.mxu0 0
    %387 = vmatpush1.bf16.msra.mxu0 %v127
    %388 = vmatprep.mubr.bf16.mxu0 %v264
    %389 = vmatmul.mubr.bf16.gmra.mrb[0].mxu0 %v263
    %v390 = vpop.f32.mrb[0].mxu0
    %v391 = vadd.f32 %v351, %v390
    %v392 = vpop.f32.mrb[0].mxu0
    %v393 = vpop.f32.mrb[0].mxu0
    %v394 = vpop.f32.mrb[0].mxu0
    %395 = vdwg.mxu0
    %396 = vmatprep.subr.bf16.mxu0 0
    %397 = vmatpush1.bf16.msra.mxu0 %v128
    %398 = vmatprep.subr.bf16.mxu0 0
    %399 = vmatpush1.bf16.msra.mxu0 %v129
    %400 = vmatprep.subr.bf16.mxu0 0
    %401 = vmatpush1.bf16.msra.mxu0 %v130
    %402 = vmatprep.subr.bf16.mxu0 0
    %403 = vmatpush1.bf16.msra.mxu0 %v131
    %404 = vmatprep.subr.bf16.mxu0 0
    %405 = vmatpush1.bf16.msra.mxu0 %v132
    %406 = vmatprep.subr.bf16.mxu0 0
    %407 = vmatpush1.bf16.msra.mxu0 %v133
    %408 = vmatprep.subr.bf16.mxu0 0
    %409 = vmatpush1.bf16.msra.mxu0 %v134
    %410 = vmatprep.subr.bf16.mxu0 0
    %411 = vmatpush1.bf16.msra.mxu0 %v135
    %412 = vmatprep.subr.bf16.mxu0 0
    %413 = vmatpush1.bf16.msra.mxu0 %v136
    %414 = vmatprep.subr.bf16.mxu0 0
    %415 = vmatpush1.bf16.msra.mxu0 %v137
    %416 = vmatprep.subr.bf16.mxu0 0
    %417 = vmatpush1.bf16.msra.mxu0 %v138
    %418 = vmatprep.subr.bf16.mxu0 0
    %419 = vmatpush1.bf16.msra.mxu0 %v139
    %420 = vmatprep.subr.bf16.mxu0 0
    %421 = vmatpush1.bf16.msra.mxu0 %v140
    %422 = vmatprep.subr.bf16.mxu0 0
    %423 = vmatpush1.bf16.msra.mxu0 %v141
    %424 = vmatprep.subr.bf16.mxu0 0
    %425 = vmatpush1.bf16.msra.mxu0 %v142
    %426 = vmatprep.subr.bf16.mxu0 0
    %427 = vmatpush1.bf16.msra.mxu0 %v143
    %428 = vmatprep.mubr.bf16.mxu0 %v266
    %429 = vmatmul.mubr.bf16.gmra.mrb[0].mxu0 %v265
    %v430 = vpop.f32.mrb[0].mxu0
    %v431 = vadd.f32 %v391, %v430
    %v432 = vpop.f32.mrb[0].mxu0
    %v433 = vpop.f32.mrb[0].mxu0
    %v434 = vpop.f32.mrb[0].mxu0
    %435 = vdwg.mxu0
    %436 = vmatprep.subr.bf16.mxu0 0
    %437 = vmatpush1.bf16.msra.mxu0 %v144
    %438 = vmatprep.subr.bf16.mxu0 0
    %439 = vmatpush1.bf16.msra.mxu0 %v145
    %440 = vmatprep.subr.bf16.mxu0 0
    %441 = vmatpush1.bf16.msra.mxu0 %v146
    %442 = vmatprep.subr.bf16.mxu0 0
    %443 = vmatpush1.bf16.msra.mxu0 %v147
    %444 = vmatprep.subr.bf16.mxu0 0
    %445 = vmatpush1.bf16.msra.mxu0 %v148
    %446 = vmatprep.subr.bf16.mxu0 0
    %447 = vmatpush1.bf16.msra.mxu0 %v149
    %448 = vmatprep.subr.bf16.mxu0 0
    %449 = vmatpush1.bf16.msra.mxu0 %v150
    %450 = vmatprep.subr.bf16.mxu0 0
    %451 = vmatpush1.bf16.msra.mxu0 %v151
    %452 = vmatprep.subr.bf16.mxu0 0
    %453 = vmatpush1.bf16.msra.mxu0 %v152
    %454 = vmatprep.subr.bf16.mxu0 0
    %455 = vmatpush1.bf16.msra.mxu0 %v153
    %456 = vmatprep.subr.bf16.mxu0 0
    %457 = vmatpush1.bf16.msra.mxu0 %v154
    %458 = vmatprep.subr.bf16.mxu0 0
    %459 = vmatpush1.bf16.msra.mxu0 %v155
    %460 = vmatprep.subr.bf16.mxu0 0
    %461 = vmatpush1.bf16.msra.mxu0 %v156
    %462 = vmatprep.subr.bf16.mxu0 0
    %463 = vmatpush1.bf16.msra.mxu0 %v157
    %464 = vmatprep.subr.bf16.mxu0 0
    %465 = vmatpush1.bf16.msra.mxu0 %v158
    %466 = vmatprep.subr.bf16.mxu0 0
    %467 = vmatpush1.bf16.msra.mxu0 %v159
    %468 = vmatprep.mubr.bf16.mxu0 %v268
    %469 = vmatmul.mubr.bf16.gmra.mrb[0].mxu0 %v267
    %v470 = vpop.f32.mrb[0].mxu0
    %v471 = vadd.f32 %v431, %v470
    %v472 = vpop.f32.mrb[0].mxu0
    %v473 = vpop.f32.mrb[0].mxu0
    %v474 = vpop.f32.mrb[0].mxu0
    %475 = vdwg.mxu0
    %476 = vmatprep.subr.bf16.mxu0 0
    %477 = vmatpush1.bf16.msra.mxu0 %v160
    %478 = vmatprep.subr.bf16.mxu0 0
    %479 = vmatpush1.bf16.msra.mxu0 %v161
    %480 = vmatprep.subr.bf16.mxu0 0
    %481 = vmatpush1.bf16.msra.mxu0 %v162
    %482 = vmatprep.subr.bf16.mxu0 0
    %483 = vmatpush1.bf16.msra.mxu0 %v163
    %484 = vmatprep.subr.bf16.mxu0 0
    %485 = vmatpush1.bf16.msra.mxu0 %v164
    %486 = vmatprep.subr.bf16.mxu0 0
    %487 = vmatpush1.bf16.msra.mxu0 %v165
    %488 = vmatprep.subr.bf16.mxu0 0
    %489 = vmatpush1.bf16.msra.mxu0 %v166
    %490 = vmatprep.subr.bf16.mxu0 0
    %491 = vmatpush1.bf16.msra.mxu0 %v167
    %492 = vmatprep.subr.bf16.mxu0 0
    %493 = vmatpush1.bf16.msra.mxu0 %v168
    %494 = vmatprep.subr.bf16.mxu0 0
    %495 = vmatpush1.bf16.msra.mxu0 %v169
    %496 = vmatprep.subr.bf16.mxu0 0
    %497 = vmatpush1.bf16.msra.mxu0 %v170
    %498 = vmatprep.subr.bf16.mxu0 0
    %499 = vmatpush1.bf16.msra.mxu0 %v171
    %500 = vmatprep.subr.bf16.mxu0 0
    %501 = vmatpush1.bf16.msra.mxu0 %v172
    %502 = vmatprep.subr.bf16.mxu0 0
    %503 = vmatpush1.bf16.msra.mxu0 %v173
    %504 = vmatprep.subr.bf16.mxu0 0
    %505 = vmatpush1.bf16.msra.mxu0 %v174
    %506 = vmatprep.subr.bf16.mxu0 0
    %507 = vmatpush1.bf16.msra.mxu0 %v175
    %508 = vmatprep.mubr.bf16.mxu0 %v270
    %509 = vmatmul.mubr.bf16.gmra.mrb[0].mxu0 %v269
    %v510 = vpop.f32.mrb[0].mxu0
    %v511 = vadd.f32 %v471, %v510
    %v512 = vpop.f32.mrb[0].mxu0
    %v513 = vpop.f32.mrb[0].mxu0
    %v514 = vpop.f32.mrb[0].mxu0
    %515 = vdwg.mxu0
    %516 = vmatprep.subr.bf16.mxu0 0
    %517 = vmatpush1.bf16.msra.mxu0 %v176
    %518 = vmatprep.subr.bf16.mxu0 0
    %519 = vmatpush1.bf16.msra.mxu0 %v177
    %520 = vmatprep.subr.bf16.mxu0 0
    %521 = vmatpush1.bf16.msra.mxu0 %v178
    %522 = vmatprep.subr.bf16.mxu0 0
    %523 = vmatpush1.bf16.msra.mxu0 %v179
    %524 = vmatprep.subr.bf16.mxu0 0
    %525 = vmatpush1.bf16.msra.mxu0 0
    %526 = vmatprep.subr.bf16.mxu0 0
    %527 = vmatpush1.bf16.msra.mxu0 0
    %528 = vmatprep.subr.bf16.mxu0 0
    %529 = vmatpush1.bf16.msra.mxu0 0
    %530 = vmatprep.subr.bf16.mxu0 0
    %531 = vmatpush1.bf16.msra.mxu0 0
    %532 = vmatprep.subr.bf16.mxu0 0
    %533 = vmatpush1.bf16.msra.mxu0 0
    %534 = vmatprep.subr.bf16.mxu0 0
    %535 = vmatpush1.bf16.msra.mxu0 0
    %536 = vmatprep.subr.bf16.mxu0 0
    %537 = vmatpush1.bf16.msra.mxu0 0
    %538 = vmatprep.subr.bf16.mxu0 0
    %539 = vmatpush1.bf16.msra.mxu0 0
    %540 = vmatprep.subr.bf16.mxu0 0
    %541 = vmatpush1.bf16.msra.mxu0 0
    %542 = vmatprep.subr.bf16.mxu0 0
    %543 = vmatpush1.bf16.msra.mxu0 0
    %544 = vmatprep.subr.bf16.mxu0 0
    %545 = vmatpush1.bf16.msra.mxu0 0
    %546 = vmatprep.subr.bf16.mxu0 0
    %547 = vmatpush1.bf16.msra.mxu0 0
    %548 = vmatprep.mubr.bf16.mxu0 0
    %549 = vmatmul.mubr.bf16.gmra.mrb[0].mxu0 %v274
    %v550 = vpop.f32.mrb[0].mxu0
    %v551 = vadd.f32 %v511, %v550
    %v552 = vpop.f32.mrb[0].mxu0
    %v553 = vpop.f32.mrb[0].mxu0
    %v554 = vpop.f32.mrb[0].mxu0
    %555 = vdwg.mxu0
    %v556 = vld [vmem:[%s2] sm:$0x1]
    %v558 = vlaneseq
    %v559 = vshrl.u32 %v558, 7
    %v560 = vsub.s32 0, %v559
    %v561 = vrot.slane %v556, %v560
    %v563 = vmul.f32 %v551, %v561
    %v564 = vld [vmem:[%s3] sm:$0x1]
    %v566 = vlaneseq
    %v567 = vshrl.u32 %v566, 7
    %v568 = vsub.s32 0, %v567
    %v569 = vrot.slane %v564, %v568
    %v571 = vadd.f32 %v563, %v569
    %vm572 = vcmask 517120
    %573 = vst.msk [vmem:[#allocation2] sm:$0x3] %vm572, %v571
    %v574 = vld [vmem:[%s4] sm:$0xff]
    %v575 = vld [vmem:[%s4 + $0x8] sm:$0xff]
    %v576 = vld [vmem:[%s4 + $0x10] sm:$0xff]
    %v577 = vld [vmem:[%s4 + $0x18] sm:$0xff]
    %v578 = vld [vmem:[%s4 + $0x20] sm:$0xff]
    %v579 = vld [vmem:[%s4 + $0x28] sm:$0xff]
    %v580 = vld [vmem:[%s4 + $0x30] sm:$0xff]
    %v581 = vld [vmem:[%s4 + $0x38] sm:$0xff]
    %v582 = vld [vmem:[%s4 + $0x40] sm:$0xff]
    %v583 = vld [vmem:[%s4 + $0x48] sm:$0xff]
    %v584 = vld [vmem:[%s4 + $0x50] sm:$0xff]
    %v585 = vld [vmem:[%s4 + $0x58] sm:$0xff]
    %v586 = vld [vmem:[%s4 + $0x60] sm:$0xff]
    %v587 = vld [vmem:[%s4 + $0x68] sm:$0xff]
    %v588 = vld [vmem:[%s4 + $0x70] sm:$0xff]
    %v589 = vld [vmem:[%s4 + $0x78] sm:$0xff]
    %v590 = vld [vmem:[%s4 + $0x80] sm:$0xff]
    %v591 = vld [vmem:[%s4 + $0x88] sm:$0xff]
    %v592 = vld [vmem:[%s4 + $0x90] sm:$0xff]
    %v593 = vld [vmem:[%s4 + $0x98] sm:$0xff]
    %v594 = vld [vmem:[%s4 + $0xa0] sm:$0xff]
    %v595 = vld [vmem:[%s4 + $0xa8] sm:$0xff]
    %v596 = vld [vmem:[%s4 + $0xb0] sm:$0xff]
    %v597 = vld [vmem:[%s4 + $0xb8] sm:$0xff]
    %v598 = vld [vmem:[%s4 + $0xc0] sm:$0xff]
    %v599 = vld [vmem:[%s4 + $0xc8] sm:$0xff]
    %v600 = vunpack.c.l.s8.bf16 %v574
    %v601 = vunpack.c.l.s8.bf16 %v575
    %v602 = vunpack.c.l.s8.bf16 %v576
    %v603 = vunpack.c.l.s8.bf16 %v577
    %v604 = vunpack.c.l.s8.bf16 %v578
    %v605 = vunpack.c.l.s8.bf16 %v579
    %v606 = vunpack.c.l.s8.bf16 %v580
    %v607 = vunpack.c.l.s8.bf16 %v581
    %v608 = vunpack.c.l.s8.bf16 %v582
    %v609 = vunpack.c.l.s8.bf16 %v583
    %v610 = vunpack.c.l.s8.bf16 %v584
    %v611 = vunpack.c.l.s8.bf16 %v585
    %v612 = vunpack.c.l.s8.bf16 %v586
    %v613 = vunpack.c.h.s8.bf16 %v574
    %v614 = vunpack.c.h.s8.bf16 %v575
    %v615 = vunpack.c.h.s8.bf16 %v576
    %v616 = vunpack.c.h.s8.bf16 %v577
    %v617 = vunpack.c.h.s8.bf16 %v578
    %v618 = vunpack.c.h.s8.bf16 %v579
    %v619 = vunpack.c.h.s8.bf16 %v580
    %v620 = vunpack.c.h.s8.bf16 %v581
    %v621 = vunpack.c.h.s8.bf16 %v582
    %v622 = vunpack.c.h.s8.bf16 %v583
    %v623 = vunpack.c.h.s8.bf16 %v584
    %v624 = vunpack.c.h.s8.bf16 %v585
    %v625 = vunpack.c.h.s8.bf16 %v586
    %v626 = vunpack.c.l.s8.bf16 %v587
    %v627 = vunpack.c.l.s8.bf16 %v588
    %v628 = vunpack.c.l.s8.bf16 %v589
    %v629 = vunpack.c.l.s8.bf16 %v590
    %v630 = vunpack.c.l.s8.bf16 %v591
    %v631 = vunpack.c.l.s8.bf16 %v592
    %v632 = vunpack.c.l.s8.bf16 %v593
    %v633 = vunpack.c.l.s8.bf16 %v594
    %v634 = vunpack.c.l.s8.bf16 %v595
    %v635 = vunpack.c.l.s8.bf16 %v596
    %v636 = vunpack.c.l.s8.bf16 %v597
    %v637 = vunpack.c.l.s8.bf16 %v598
    %v638 = vunpack.c.l.s8.bf16 %v599
    %v639 = vunpack.c.h.s8.bf16 %v587
    %v640 = vunpack.c.h.s8.bf16 %v588
    %v641 = vunpack.c.h.s8.bf16 %v589
    %v642 = vunpack.c.h.s8.bf16 %v590
    %v643 = vunpack.c.h.s8.bf16 %v591
    %v644 = vunpack.c.h.s8.bf16 %v592
    %v645 = vunpack.c.h.s8.bf16 %v593
    %v646 = vunpack.c.h.s8.bf16 %v594
    %v647 = vunpack.c.h.s8.bf16 %v595
    %v648 = vunpack.c.h.s8.bf16 %v596
    %v649 = vunpack.c.h.s8.bf16 %v597
    %v650 = vunpack.c.h.s8.bf16 %v598
    %v651 = vunpack.c.h.s8.bf16 %v599
    %v652 = vpack.c.bf16 %v571, %v571
    %v654 = vsel %vm272, %v652, 0
    %656 = vmatprep.subr.bf16.mxu0 %v601
    %657 = vmatpush1.bf16.msra.mxu0 %v600
    %658 = vmatprep.subr.bf16.mxu0 %v614
    %659 = vmatpush1.bf16.msra.mxu0 %v613
    %660 = vmatprep.subr.bf16.mxu0 %v627
    %661 = vmatpush1.bf16.msra.mxu0 %v626
    %662 = vmatprep.subr.bf16.mxu0 %v640
    %663 = vmatpush1.bf16.msra.mxu0 %v639
    %664 = vmatprep.subr.bf16.mxu0 0
    %665 = vmatpush1.bf16.msra.mxu0 0
    %666 = vmatprep.subr.bf16.mxu0 0
    %667 = vmatpush1.bf16.msra.mxu0 0
    %668 = vmatprep.subr.bf16.mxu0 0
    %669 = vmatpush1.bf16.msra.mxu0 0
    %670 = vmatprep.subr.bf16.mxu0 0
    %671 = vmatpush1.bf16.msra.mxu0 0
    %672 = vmatprep.subr.bf16.mxu0 0
    %673 = vmatpush1.bf16.msra.mxu0 0
    %674 = vmatprep.subr.bf16.mxu0 0
    %675 = vmatpush1.bf16.msra.mxu0 0
    %676 = vmatprep.subr.bf16.mxu0 0
    %677 = vmatpush1.bf16.msra.mxu0 0
    %678 = vmatprep.subr.bf16.mxu0 0
    %679 = vmatpush1.bf16.msra.mxu0 0
    %680 = vmatprep.subr.bf16.mxu0 0
    %681 = vmatpush1.bf16.msra.mxu0 0
    %682 = vmatprep.subr.bf16.mxu0 0
    %683 = vmatpush1.bf16.msra.mxu0 0
    %684 = vmatprep.subr.bf16.mxu0 0
    %685 = vmatpush1.bf16.msra.mxu0 0
    %686 = vmatprep.subr.bf16.mxu0 0
    %687 = vmatpush1.bf16.msra.mxu0 0
    %688 = vmatprep.mubr.bf16.mxu0 0
    %689 = vmatmul.mubr.bf16.gmra.mrb[0].mxu0 %v654
    %v690 = vpop.f32.mrb[0].mxu0
    %v691 = vadd.f32 0.0, %v690
    %v692 = vpop.f32.mrb[0].mxu0
    %v693 = vadd.f32 0.0, %v692
    %v694 = vpop.f32.mrb[0].mxu0
    %v695 = vpop.f32.mrb[0].mxu0
    %696 = vdwg.mxu0
    %697 = vmatprep.subr.bf16.mxu0 %v603
    %698 = vmatpush1.bf16.msra.mxu0 %v602
    %699 = vmatprep.subr.bf16.mxu0 %v616
    %700 = vmatpush1.bf16.msra.mxu0 %v615
    %701 = vmatprep.subr.bf16.mxu0 %v629
    %702 = vmatpush1.bf16.msra.mxu0 %v628
    %703 = vmatprep.subr.bf16.mxu0 %v642
    %704 = vmatpush1.bf16.msra.mxu0 %v641
    %705 = vmatprep.subr.bf16.mxu0 0
    %706 = vmatpush1.bf16.msra.mxu0 0
    %707 = vmatprep.subr.bf16.mxu0 0
    %708 = vmatpush1.bf16.msra.mxu0 0
    %709 = vmatprep.subr.bf16.mxu0 0
    %710 = vmatpush1.bf16.msra.mxu0 0
    %711 = vmatprep.subr.bf16.mxu0 0
    %712 = vmatpush1.bf16.msra.mxu0 0
    %713 = vmatprep.subr.bf16.mxu0 0
    %714 = vmatpush1.bf16.msra.mxu0 0
    %715 = vmatprep.subr.bf16.mxu0 0
    %716 = vmatpush1.bf16.msra.mxu0 0
    %717 = vmatprep.subr.bf16.mxu0 0
    %718 = vmatpush1.bf16.msra.mxu0 0
    %719 = vmatprep.subr.bf16.mxu0 0
    %720 = vmatpush1.bf16.msra.mxu0 0
    %721 = vmatprep.subr.bf16.mxu0 0
    %722 = vmatpush1.bf16.msra.mxu0 0
    %723 = vmatprep.subr.bf16.mxu0 0
    %724 = vmatpush1.bf16.msra.mxu0 0
    %725 = vmatprep.subr.bf16.mxu0 0
    %726 = vmatpush1.bf16.msra.mxu0 0
    %727 = vmatprep.subr.bf16.mxu0 0
    %728 = vmatpush1.bf16.msra.mxu0 0
    %729 = vmatprep.mubr.bf16.mxu0 0
    %730 = vmatmul.mubr.bf16.gmra.mrb[0].mxu0 %v654
    %v731 = vpop.f32.mrb[0].mxu0
    %v732 = vadd.f32 0.0, %v731
    %v733 = vpop.f32.mrb[0].mxu0
    %v734 = vadd.f32 0.0, %v733
    %v735 = vpop.f32.mrb[0].mxu0
    %v736 = vpop.f32.mrb[0].mxu0
    %737 = vdwg.mxu0
    %738 = vmatprep.subr.bf16.mxu0 %v605
    %739 = vmatpush1.bf16.msra.mxu0 %v604
    %740 = vmatprep.subr.bf16.mxu0 %v618
    %741 = vmatpush1.bf16.msra.mxu0 %v617
    %742 = vmatprep.subr.bf16.mxu0 %v631
    %743 = vmatpush1.bf16.msra.mxu0 %v630
    %744 = vmatprep.subr.bf16.mxu0 %v644
    %745 = vmatpush1.bf16.msra.mxu0 %v643
    %746 = vmatprep.subr.bf16.mxu0 0
    %747 = vmatpush1.bf16.msra.mxu0 0
    %748 = vmatprep.subr.bf16.mxu0 0
    %749 = vmatpush1.bf16.msra.mxu0 0
    %750 = vmatprep.subr.bf16.mxu0 0
    %751 = vmatpush1.bf16.msra.mxu0 0
    %752 = vmatprep.subr.bf16.mxu0 0
    %753 = vmatpush1.bf16.msra.mxu0 0
    %754 = vmatprep.subr.bf16.mxu0 0
    %755 = vmatpush1.bf16.msra.mxu0 0
    %756 = vmatprep.subr.bf16.mxu0 0
    %757 = vmatpush1.bf16.msra.mxu0 0
    %758 = vmatprep.subr.bf16.mxu0 0
    %759 = vmatpush1.bf16.msra.mxu0 0
    %760 = vmatprep.subr.bf16.mxu0 0
    %761 = vmatpush1.bf16.msra.mxu0 0
    %762 = vmatprep.subr.bf16.mxu0 0
    %763 = vmatpush1.bf16.msra.mxu0 0
    %764 = vmatprep.subr.bf16.mxu0 0
    %765 = vmatpush1.bf16.msra.mxu0 0
    %766 = vmatprep.subr.bf16.mxu0 0
    %767 = vmatpush1.bf16.msra.mxu0 0
    %768 = vmatprep.subr.bf16.mxu0 0
    %769 = vmatpush1.bf16.msra.mxu0 0
    %770 = vmatprep.mubr.bf16.mxu0 0
    %771 = vmatmul.mubr.bf16.gmra.mrb[0].mxu0 %v654
    %v772 = vpop.f32.mrb[0].mxu0
    %v773 = vadd.f32 0.0, %v772
    %v774 = vpop.f32.mrb[0].mxu0
    %v775 = vadd.f32 0.0, %v774
    %v776 = vpop.f32.mrb[0].mxu0
    %v777 = vpop.f32.mrb[0].mxu0
    %778 = vdwg.mxu0
    %779 = vmatprep.subr.bf16.mxu0 %v607
    %780 = vmatpush1.bf16.msra.mxu0 %v606
    %781 = vmatprep.subr.bf16.mxu0 %v620
    %782 = vmatpush1.bf16.msra.mxu0 %v619
    %783 = vmatprep.subr.bf16.mxu0 %v633
    %784 = vmatpush1.bf16.msra.mxu0 %v632
    %785 = vmatprep.subr.bf16.mxu0 %v646
    %786 = vmatpush1.bf16.msra.mxu0 %v645
    %787 = vmatprep.subr.bf16.mxu0 0
    %788 = vmatpush1.bf16.msra.mxu0 0
    %789 = vmatprep.subr.bf16.mxu0 0
    %790 = vmatpush1.bf16.msra.mxu0 0
    %791 = vmatprep.subr.bf16.mxu0 0
    %792 = vmatpush1.bf16.msra.mxu0 0
    %793 = vmatprep.subr.bf16.mxu0 0
    %794 = vmatpush1.bf16.msra.mxu0 0
    %795 = vmatprep.subr.bf16.mxu0 0
    %796 = vmatpush1.bf16.msra.mxu0 0
    %797 = vmatprep.subr.bf16.mxu0 0
    %798 = vmatpush1.bf16.msra.mxu0 0
    %799 = vmatprep.subr.bf16.mxu0 0
    %800 = vmatpush1.bf16.msra.mxu0 0
    %801 = vmatprep.subr.bf16.mxu0 0
    %802 = vmatpush1.bf16.msra.mxu0 0
    %803 = vmatprep.subr.bf16.mxu0 0
    %804 = vmatpush1.bf16.msra.mxu0 0
    %805 = vmatprep.subr.bf16.mxu0 0
    %806 = vmatpush1.bf16.msra.mxu0 0
    %807 = vmatprep.subr.bf16.mxu0 0
    %808 = vmatpush1.bf16.msra.mxu0 0
    %809 = vmatprep.subr.bf16.mxu0 0
    %810 = vmatpush1.bf16.msra.mxu0 0
    %811 = vmatprep.mubr.bf16.mxu0 0
    %812 = vmatmul.mubr.bf16.gmra.mrb[0].mxu0 %v654
    %v813 = vpop.f32.mrb[0].mxu0
    %v814 = vadd.f32 0.0, %v813
    %v815 = vpop.f32.mrb[0].mxu0
    %v816 = vadd.f32 0.0, %v815
    %v817 = vpop.f32.mrb[0].mxu0
    %v818 = vpop.f32.mrb[0].mxu0
    %819 = vdwg.mxu0
    %820 = vmatprep.subr.bf16.mxu0 %v609
    %821 = vmatpush1.bf16.msra.mxu0 %v608
    %822 = vmatprep.subr.bf16.mxu0 %v622
    %823 = vmatpush1.bf16.msra.mxu0 %v621
    %824 = vmatprep.subr.bf16.mxu0 %v635
    %825 = vmatpush1.bf16.msra.mxu0 %v634
    %826 = vmatprep.subr.bf16.mxu0 %v648
    %827 = vmatpush1.bf16.msra.mxu0 %v647
    %828 = vmatprep.subr.bf16.mxu0 0
    %829 = vmatpush1.bf16.msra.mxu0 0
    %830 = vmatprep.subr.bf16.mxu0 0
    %831 = vmatpush1.bf16.msra.mxu0 0
    %832 = vmatprep.subr.bf16.mxu0 0
    %833 = vmatpush1.bf16.msra.mxu0 0
    %834 = vmatprep.subr.bf16.mxu0 0
    %835 = vmatpush1.bf16.msra.mxu0 0
    %836 = vmatprep.subr.bf16.mxu0 0
    %837 = vmatpush1.bf16.msra.mxu0 0
    %838 = vmatprep.subr.bf16.mxu0 0
    %839 = vmatpush1.bf16.msra.mxu0 0
    %840 = vmatprep.subr.bf16.mxu0 0
    %841 = vmatpush1.bf16.msra.mxu0 0
    %842 = vmatprep.subr.bf16.mxu0 0
    %843 = vmatpush1.bf16.msra.mxu0 0
    %844 = vmatprep.subr.bf16.mxu0 0
    %845 = vmatpush1.bf16.msra.mxu0 0
    %846 = vmatprep.subr.bf16.mxu0 0
    %847 = vmatpush1.bf16.msra.mxu0 0
    %848 = vmatprep.subr.bf16.mxu0 0
    %849 = vmatpush1.bf16.msra.mxu0 0
    %850 = vmatprep.subr.bf16.mxu0 0
    %851 = vmatpush1.bf16.msra.mxu0 0
    %852 = vmatprep.mubr.bf16.mxu0 0
    %853 = vmatmul.mubr.bf16.gmra.mrb[0].mxu0 %v654
    %v854 = vpop.f32.mrb[0].mxu0
    %v855 = vadd.f32 0.0, %v854
    %v856 = vpop.f32.mrb[0].mxu0
    %v857 = vadd.f32 0.0, %v856
    %v858 = vpop.f32.mrb[0].mxu0
    %v859 = vpop.f32.mrb[0].mxu0
    %860 = vdwg.mxu0
    %861 = vmatprep.subr.bf16.mxu0 %v611
    %862 = vmatpush1.bf16.msra.mxu0 %v610
    %863 = vmatprep.subr.bf16.mxu0 %v624
    %864 = vmatpush1.bf16.msra.mxu0 %v623
    %865 = vmatprep.subr.bf16.mxu0 %v637
    %866 = vmatpush1.bf16.msra.mxu0 %v636
    %867 = vmatprep.subr.bf16.mxu0 %v650
    %868 = vmatpush1.bf16.msra.mxu0 %v649
    %869 = vmatprep.subr.bf16.mxu0 0
    %870 = vmatpush1.bf16.msra.mxu0 0
    %871 = vmatprep.subr.bf16.mxu0 0
    %872 = vmatpush1.bf16.msra.mxu0 0
    %873 = vmatprep.subr.bf16.mxu0 0
    %874 = vmatpush1.bf16.msra.mxu0 0
    %875 = vmatprep.subr.bf16.mxu0 0
    %876 = vmatpush1.bf16.msra.mxu0 0
    %877 = vmatprep.subr.bf16.mxu0 0
    %878 = vmatpush1.bf16.msra.mxu0 0
    %879 = vmatprep.subr.bf16.mxu0 0
    %880 = vmatpush1.bf16.msra.mxu0 0
    %881 = vmatprep.subr.bf16.mxu0 0
    %882 = vmatpush1.bf16.msra.mxu0 0
    %883 = vmatprep.subr.bf16.mxu0 0
    %884 = vmatpush1.bf16.msra.mxu0 0
    %885 = vmatprep.subr.bf16.mxu0 0
    %886 = vmatpush1.bf16.msra.mxu0 0
    %887 = vmatprep.subr.bf16.mxu0 0
    %888 = vmatpush1.bf16.msra.mxu0 0
    %889 = vmatprep.subr.bf16.mxu0 0
    %890 = vmatpush1.bf16.msra.mxu0 0
    %891 = vmatprep.subr.bf16.mxu0 0
    %892 = vmatpush1.bf16.msra.mxu0 0
    %893 = vmatprep.mubr.bf16.mxu0 0
    %894 = vmatmul.mubr.bf16.gmra.mrb[0].mxu0 %v654
    %v895 = vpop.f32.mrb[0].mxu0
    %v896 = vadd.f32 0.0, %v895
    %v897 = vpop.f32.mrb[0].mxu0
    %v898 = vadd.f32 0.0, %v897
    %v899 = vpop.f32.mrb[0].mxu0
    %v900 = vpop.f32.mrb[0].mxu0
    %901 = vdwg.mxu0
    %902 = vmatprep.subr.bf16.mxu0 0
    %903 = vmatpush1.bf16.msra.mxu0 %v612
    %904 = vmatprep.subr.bf16.mxu0 0
    %905 = vmatpush1.bf16.msra.mxu0 %v625
    %906 = vmatprep.subr.bf16.mxu0 0
    %907 = vmatpush1.bf16.msra.mxu0 %v638
    %908 = vmatprep.subr.bf16.mxu0 0
    %909 = vmatpush1.bf16.msra.mxu0 %v651
    %910 = vmatprep.subr.bf16.mxu0 0
    %911 = vmatpush1.bf16.msra.mxu0 0
    %912 = vmatprep.subr.bf16.mxu0 0
    %913 = vmatpush1.bf16.msra.mxu0 0
    %914 = vmatprep.subr.bf16.mxu0 0
    %915 = vmatpush1.bf16.msra.mxu0 0
    %916 = vmatprep.subr.bf16.mxu0 0
    %917 = vmatpush1.bf16.msra.mxu0 0
    %918 = vmatprep.subr.bf16.mxu0 0
    %919 = vmatpush1.bf16.msra.mxu0 0
    %920 = vmatprep.subr.bf16.mxu0 0
    %921 = vmatpush1.bf16.msra.mxu0 0
    %922 = vmatprep.subr.bf16.mxu0 0
    %923 = vmatpush1.bf16.msra.mxu0 0
    %924 = vmatprep.subr.bf16.mxu0 0
    %925 = vmatpush1.bf16.msra.mxu0 0
    %926 = vmatprep.subr.bf16.mxu0 0
    %927 = vmatpush1.bf16.msra.mxu0 0
    %928 = vmatprep.subr.bf16.mxu0 0
    %929 = vmatpush1.bf16.msra.mxu0 0
    %930 = vmatprep.subr.bf16.mxu0 0
    %931 = vmatpush1.bf16.msra.mxu0 0
    %932 = vmatprep.subr.bf16.mxu0 0
    %933 = vmatpush1.bf16.msra.mxu0 0
    %934 = vmatprep.mubr.bf16.mxu0 0
    %935 = vmatmul.mubr.bf16.gmra.mrb[0].mxu0 %v654
    %v936 = vpop.f32.mrb[0].mxu0
    %v937 = vadd.f32 0.0, %v936
    %v938 = vpop.f32.mrb[0].mxu0
    %v939 = vpop.f32.mrb[0].mxu0
    %v940 = vpop.f32.mrb[0].mxu0
    %941 = vdwg.mxu0
    %v942 = vld [vmem:[%s5] sm:$0xff]
    %v943 = vld [vmem:[%s5 + $0x8] sm:$0x1f]
    %v946 = vlaneseq
    %v947 = vshrl.u32 %v946, 7
    %v948 = vsub.s32 0, %v947
    %v949 = vrot.slane %v942, %v948
    %v950 = vlaneseq
    %v951 = vshrl.u32 %v950, 7
    %v952 = vsub.s32 1, %v951
    %v953 = vrot.slane %v942, %v952
    %v954 = vlaneseq
    %v955 = vshrl.u32 %v954, 7
    %v956 = vsub.s32 2, %v955
    %v957 = vrot.slane %v942, %v956
    %v958 = vlaneseq
    %v959 = vshrl.u32 %v958, 7
    %v960 = vsub.s32 3, %v959
    %v961 = vrot.slane %v942, %v960
    %v962 = vlaneseq
    %v963 = vshrl.u32 %v962, 7
    %v964 = vsub.s32 4, %v963
    %v965 = vrot.slane %v942, %v964
    %v966 = vlaneseq
    %v967 = vshrl.u32 %v966, 7
    %v968 = vsub.s32 5, %v967
    %v969 = vrot.slane %v942, %v968
    %v970 = vlaneseq
    %v971 = vshrl.u32 %v970, 7
    %v972 = vsub.s32 6, %v971
    %v973 = vrot.slane %v942, %v972
    %v974 = vlaneseq
    %v975 = vshrl.u32 %v974, 7
    %v976 = vsub.s32 7, %v975
    %v977 = vrot.slane %v942, %v976
    %v978 = vlaneseq
    %v979 = vshrl.u32 %v978, 7
    %v980 = vsub.s32 0, %v979
    %v981 = vrot.slane %v943, %v980
    %v982 = vlaneseq
    %v983 = vshrl.u32 %v982, 7
    %v984 = vsub.s32 1, %v983
    %v985 = vrot.slane %v943, %v984
    %v986 = vlaneseq
    %v987 = vshrl.u32 %v986, 7
    %v988 = vsub.s32 2, %v987
    %v989 = vrot.slane %v943, %v988
    %v990 = vlaneseq
    %v991 = vshrl.u32 %v990, 7
    %v992 = vsub.s32 3, %v991
    %v993 = vrot.slane %v943, %v992
    %v994 = vlaneseq
    %v995 = vshrl.u32 %v994, 7
    %v996 = vsub.s32 4, %v995
    %v997 = vrot.slane %v943, %v996
    %v1011 = vmul.f32 %v691, %v949
    %v1012 = vmul.f32 %v693, %v953
    %v1013 = vmul.f32 %v732, %v957
    %v1014 = vmul.f32 %v734, %v961
    %v1015 = vmul.f32 %v773, %v965
    %v1016 = vmul.f32 %v775, %v969
    %v1017 = vmul.f32 %v814, %v973
    %v1018 = vmul.f32 %v816, %v977
    %v1019 = vmul.f32 %v855, %v981
    %v1020 = vmul.f32 %v857, %v985
    %v1021 = vmul.f32 %v896, %v989
    %v1022 = vmul.f32 %v898, %v993
    %v1023 = vmul.f32 %v937, %v997
    %v1024 = vld [vmem:[%s6] sm:$0xff]
    %v1025 = vld [vmem:[%s6 + $0x8] sm:$0x1f]
    %v1028 = vlaneseq
    %v1029 = vshrl.u32 %v1028, 7
    %v1030 = vsub.s32 0, %v1029
    %v1031 = vrot.slane %v1024, %v1030
    %v1032 = vlaneseq
    %v1033 = vshrl.u32 %v1032, 7
    %v1034 = vsub.s32 1, %v1033
    %v1035 = vrot.slane %v1024, %v1034
    %v1036 = vlaneseq
    %v1037 = vshrl.u32 %v1036, 7
    %v1038 = vsub.s32 2, %v1037
    %v1039 = vrot.slane %v1024, %v1038
    %v1040 = vlaneseq
    %v1041 = vshrl.u32 %v1040, 7
    %v1042 = vsub.s32 3, %v1041
    %v1043 = vrot.slane %v1024, %v1042
    %v1044 = vlaneseq
    %v1045 = vshrl.u32 %v1044, 7
    %v1046 = vsub.s32 4, %v1045
    %v1047 = vrot.slane %v1024, %v1046
    %v1048 = vlaneseq
    %v1049 = vshrl.u32 %v1048, 7
    %v1050 = vsub.s32 5, %v1049
    %v1051 = vrot.slane %v1024, %v1050
    %v1052 = vlaneseq
    %v1053 = vshrl.u32 %v1052, 7
    %v1054 = vsub.s32 6, %v1053
    %v1055 = vrot.slane %v1024, %v1054
    %v1056 = vlaneseq
    %v1057 = vshrl.u32 %v1056, 7
    %v1058 = vsub.s32 7, %v1057
    %v1059 = vrot.slane %v1024, %v1058
    %v1060 = vlaneseq
    %v1061 = vshrl.u32 %v1060, 7
    %v1062 = vsub.s32 0, %v1061
    %v1063 = vrot.slane %v1025, %v1062
    %v1064 = vlaneseq
    %v1065 = vshrl.u32 %v1064, 7
    %v1066 = vsub.s32 1, %v1065
    %v1067 = vrot.slane %v1025, %v1066
    %v1068 = vlaneseq
    %v1069 = vshrl.u32 %v1068, 7
    %v1070 = vsub.s32 2, %v1069
    %v1071 = vrot.slane %v1025, %v1070
    %v1072 = vlaneseq
    %v1073 = vshrl.u32 %v1072, 7
    %v1074 = vsub.s32 3, %v1073
    %v1075 = vrot.slane %v1025, %v1074
    %v1076 = vlaneseq
    %v1077 = vshrl.u32 %v1076, 7
    %v1078 = vsub.s32 4, %v1077
    %v1079 = vrot.slane %v1025, %v1078
    %v1093 = vadd.f32 %v1011, %v1031
    %v1094 = vadd.f32 %v1012, %v1035
    %v1095 = vadd.f32 %v1013, %v1039
    %v1096 = vadd.f32 %v1014, %v1043
    %v1097 = vadd.f32 %v1015, %v1047
    %v1098 = vadd.f32 %v1016, %v1051
    %v1099 = vadd.f32 %v1017, %v1055
    %v1100 = vadd.f32 %v1018, %v1059
    %v1101 = vadd.f32 %v1019, %v1063
    %v1102 = vadd.f32 %v1020, %v1067
    %v1103 = vadd.f32 %v1021, %v1071
    %v1104 = vadd.f32 %v1022, %v1075
    %v1105 = vadd.f32 %v1023, %v1079
    %v1119 = vcombine.low %v1093, %v1094
    %v1120 = vcombine.low %v1095, %v1096
    %v1122 = vunpack.c.l.s4 1983009808
    %v1123 = vunpack.c.0.s8 %v1122
    %v1124 = vlaneseq
    %v1125 = vshrl.u32 %v1124, 7
    %v1126 = vsub.s32 %v1123, %v1125
    %v1127 = vrot.slane %v1119, %v1126
    %v1129 = vunpack.c.l.s4 1983009808
    %v1130 = vunpack.c.0.s8 %v1129
    %v1131 = vlaneseq
    %v1132 = vshrl.u32 %v1131, 7
    %v1133 = vsub.s32 %v1130, %v1132
    %v1134 = vrot.slane %v1120, %v1133
    %v1135 = vcombine.low %v1127, %v1134
    %v1136 = vcombine.low %v1097, %v1098
    %v1137 = vcombine.low %v1099, %v1100
    %v1139 = vunpack.c.l.s4 1983009808
    %v1140 = vunpack.c.0.s8 %v1139
    %v1141 = vlaneseq
    %v1142 = vshrl.u32 %v1141, 7
    %v1143 = vsub.s32 %v1140, %v1142
    %v1144 = vrot.slane %v1136, %v1143
    %v1146 = vunpack.c.l.s4 1983009808
    %v1147 = vunpack.c.0.s8 %v1146
    %v1148 = vlaneseq
    %v1149 = vshrl.u32 %v1148, 7
    %v1150 = vsub.s32 %v1147, %v1149
    %v1151 = vrot.slane %v1137, %v1150
    %v1152 = vcombine.low %v1144, %v1151
    %v1153 = vcombine.low %v1101, %v1102
    %v1154 = vcombine.low %v1103, %v1104
    %v1156 = vunpack.c.l.s4 1983009808
    %v1157 = vunpack.c.0.s8 %v1156
    %v1158 = vlaneseq
    %v1159 = vshrl.u32 %v1158, 7
    %v1160 = vsub.s32 %v1157, %v1159
    %v1161 = vrot.slane %v1153, %v1160
    %v1163 = vunpack.c.l.s4 1983009808
    %v1164 = vunpack.c.0.s8 %v1163
    %v1165 = vlaneseq
    %v1166 = vshrl.u32 %v1165, 7
    %v1167 = vsub.s32 %v1164, %v1166
    %v1168 = vrot.slane %v1154, %v1167
    %v1169 = vcombine.low %v1161, %v1168
    %v1171 = vunpack.c.l.s4 1983009808
    %v1172 = vunpack.c.0.s8 %v1171
    %v1173 = vlaneseq
    %v1174 = vshrl.u32 %v1173, 7
    %v1175 = vsub.s32 %v1172, %v1174
    %v1176 = vrot.slane %v1105, %v1175
    %1181 = vst [vmem:[%s8] sm:$0xff] %v1135
    %1182 = vst [vmem:[%s8 + $0x8] sm:$0xff] %v1152
    %1183 = vst [vmem:[%s8 + $0x10] sm:$0xff] %v1169
    %1184 = vst.msk [vmem:[%s8 + $0x18] sm:$0x3] %vm572, %v1176
    // Predicated region
    $region30: #{simple_mlpae_forward.4} parent=1 // pred_check
      _
    $region31: #{simple_mlpae_forward.4} parent=1 // pred_check_branch
      %1186 = sbr.rel (0) target = $region33
    $region32: #{simple_mlpae_forward.4} parent=1 // pred_region
      %s1188 = ssub.s32 32, 32
      %1189 = vsyncadd [#allocation3], %s1188
      %s1191 = sshll.u32 [#allocation2], 4
      %s1192 = int_to_ptr.vmem [resolvable:$true] %s1191
      %1194 = dma.vmem_to_hbm [thread:$0]  %s1192, 32, %s7, [#allocation3]
    $region33: #{simple_mlpae_forward.4} parent=1 // pred_fallthru
      _
    // Predicated region
    $region34: #{simple_mlpae_forward.4} parent=1 // pred_check
      _
    $region35: #{simple_mlpae_forward.4} parent=1 // pred_check_branch
      %1196 = sbr.rel (0) target = $region37
    $region36: #{simple_mlpae_forward.4} parent=1 // pred_region
      _
    $region37: #{simple_mlpae_forward.4} parent=1 // pred_fallthru
      _
    // Predicated region
    $region38: #{simple_mlpae_forward.4} parent=1 // pred_check
      _
    $region39: #{simple_mlpae_forward.4} parent=1 // pred_check_branch
      %1198 = sbr.rel (0) target = $region41
    $region40: #{simple_mlpae_forward.4} parent=1 // pred_region
      %1199 = dma.done [#allocation3], 32
    $region41: #{simple_mlpae_forward.4} parent=1 // pred_fallthru
      _
    // Predicated region
    $region42: #{simple_mlpae_forward.4} parent=1 // pred_check
      _
    $region43: #{simple_mlpae_forward.4} parent=1 // pred_check_branch
      %1201 = sbr.rel (0) target = $region45
    $region44: #{simple_mlpae_forward.4} parent=1 // pred_region
      _
    $region45: #{simple_mlpae_forward.4} parent=1 // pred_fallthru
      _
    %1202 = vsyncpa [#allocation3], 1

</llo_original>
